<compile_context>
chip_gen: v7x
topology: tpu7x:2x2x1
jax: 0.10.0
libtpu: 0.0.40
codegen_flags: <defaults>
</compile_context>

<pallas_src>
import functools

import jax
import jax.numpy as jnp
import numpy as np
from jax.experimental import pallas as pl
from jax.experimental.pallas import tpu as pltpu

EPS = 1e-5  # nn.BatchNorm1d default eps


# ---------------------------------------------------------------------------
# Fused Pallas kernel: input_fc + all FC blocks + residual adds, all in VMEM.
# ---------------------------------------------------------------------------

def _fused_forward_kernel(x_ref, w0_ref, b0_ref, ws_ref, g_ref, be_ref, o_ref,
                          *, num_fc_blocks, num_fcs_per_block):
    _, G, B, F = x_ref.shape
    H = w0_ref.shape[1]
    inv_b = 1.0 / float(B)  # static per-group batch size

    # input_fc: bias kept (no BN follows it). bf16 operands, f32 accumulation (MXU-native).
    x = x_ref[...].reshape(G * B, F)
    net = (jnp.dot(x.astype(jnp.bfloat16), w0_ref[...],
                   preferred_element_type=jnp.float32) + b0_ref[...])

    layer = 0
    for _ in range(num_fc_blocks):
        residual = net
        for _ in range(num_fcs_per_block):
            # Linear (zero bias elided: cancelled by the train-mode BN mean subtraction).
            h = jnp.dot(net.astype(jnp.bfloat16), ws_ref[layer],
                        preferred_element_type=jnp.float32)              # (G*B, H) f32

            # Per-group batch statistics. The reshape is tile-aligned (B % 8 == 0,
            # H multiple of 128) -> no data movement; axis-1 reductions hit the XLU,
            # which is idle while the MXU/VPU work.
            h3 = h.reshape(G, B, H)
            mean = jnp.sum(h3, axis=1, keepdims=True) * inv_b             # (G, 1, H)
            centered = h3 - mean
            var = jnp.sum(centered * centered, axis=1, keepdims=True) * inv_b

            # Fold BN affine into one broadcast FMA; rsqrt goes to the EUP slot.
            scale = g_ref[layer] * jax.lax.rsqrt(var + EPS)               # (G, 1, H)
            shift = be_ref[layer] - mean * scale
            net = jnp.maximum(h3 * scale + shift, 0.0).reshape(G * B, H)  # BN + ReLU
            layer += 1
        net = net + residual
    o_ref[...] = net.reshape(1, G, B, H)


def simple_baseline_forward(params, x, weight_max_norm=0.0):
    """Fused forward.

    x: (num_tiles, groups_per_tile, batch, feature_dim). Every (batch, feature_dim)
    slice is an independent forward pass (its own BatchNorm batch). 2-D / 3-D inputs
    are promoted to 4-D. `batch` should be a multiple of 8 so in-kernel reshapes are free.
    """
    w0_t, b0 = params["w0_t"], params["b0"]
    ws_t, gammas, betas = params["ws_t"], params["gammas"], params["betas"]

    # weight_max_norm=0.0 by default -> no clipping. Frobenius norm is transpose-
    # invariant, so clipping the pre-transposed weights is equivalent (off hot path).
    if weight_max_norm > 0.0:
        def clip(w):
            wf = w.astype(jnp.float32)
            n = jnp.linalg.norm(wf)
            return jnp.where(n > weight_max_norm,
                             wf * weight_max_norm / n, wf).astype(w.dtype)
        w0_t = clip(w0_t)
        ws_t = jax.vmap(clip)(ws_t)

    orig_ndim = x.ndim
    if x.ndim == 2:        # single forward (B, F)
        x = x[None, None]
    elif x.ndim == 3:      # (G, B, F): G independent forwards in one grid step
        x = x[None]
    T, G, B, F = x.shape
    H = w0_t.shape[1]

    kernel = functools.partial(
        _fused_forward_kernel,
        num_fc_blocks=params["num_fc_blocks"],
        num_fcs_per_block=params["num_fcs_per_block"],
    )
    out = pl.pallas_call(
        kernel,
        out_shape=jax.ShapeDtypeStruct((T, G, B, H), jnp.float32),
        grid=(T,),
        in_specs=[
            pl.BlockSpec((1, G, B, F), lambda t: (t, 0, 0, 0)),   # streamed per tile
            pl.BlockSpec(w0_t.shape, lambda t: (0, 0)),           # constant index -> DMA'd once,
            pl.BlockSpec(b0.shape, lambda t: (0, 0)),             #   stays VMEM-resident
            pl.BlockSpec(ws_t.shape, lambda t: (0, 0, 0)),
            pl.BlockSpec(gammas.shape, lambda t: (0, 0, 0)),
            pl.BlockSpec(betas.shape, lambda t: (0, 0, 0)),
        ],
        out_specs=pl.BlockSpec((1, G, B, H), lambda t: (t, 0, 0, 0)),
        compiler_params=pltpu.CompilerParams(
            dimension_semantics=("parallel",),   # v7x: shard tiles across both TCs
            vmem_limit_bytes=32 * 1024 * 1024,   # explicit budget; fits v7x's 64 MiB VMEM
        ),
    )(x, w0_t, b0, ws_t, gammas, betas)

    if orig_ndim == 2:
        return out[0, 0]
    if orig_ndim == 3:
        return out[0]
    return out


# ---------------------------------------------------------------------------
# Parameter init (deterministic, matches LinearWithClipping / BatchNorm1d init).
# Weights are pre-transposed, stacked, and stored bf16 so the forward does zero
# layout work and hits the native MXU path.
# ---------------------------------------------------------------------------

def _kaiming_normal(key, out_f, in_f):
    # torch.nn.init.kaiming_normal_ default: std = sqrt(2 / fan_in)
    std = np.sqrt(2.0 / in_f)
    return jax.random.normal(key, (out_f, in_f), jnp.float32) * std


def init_simple_baseline(key, feature_dim, hidden, num_fc_blocks, num_fcs_per_block):
    # NOTE: hidden=256 is preferred on v6e/v7x (256-wide MXU); 128 exactly matches v5e.
    n_fc = num_fc_blocks * num_fcs_per_block
    keys = jax.random.split(key, 1 + n_fc)

    w0 = _kaiming_normal(keys[0], hidden, feature_dim)              # (hidden, feature_dim)
    ws = jnp.stack([_kaiming_normal(keys[1 + i], hidden, hidden)
                    for i in range(n_fc)])                          # (L, hidden, hidden)

    return {
        "num_fc_blocks": num_fc_blocks,
        "num_fcs_per_block": num_fcs_per_block,
        # Pre-transposed for x @ W layout (in_features, out_features), stored bf16.
        "w0_t": jnp.transpose(w0).astype(jnp.bfloat16),             # (feature_dim, hidden)
        "b0": jnp.zeros((1, hidden), jnp.float32),
        "ws_t": jnp.transpose(ws, (0, 2, 1)).astype(jnp.bfloat16),  # (L, hidden, hidden)
        "gammas": jnp.ones((n_fc, 1, hidden), jnp.float32),
        "betas": jnp.zeros((n_fc, 1, hidden), jnp.float32),
        # FC linear biases (zero-init). Used only by the reference; the fused kernel
        # elides them because train-mode BN cancels any per-feature bias exactly.
        # (Must be reinstated if this kernel is ever reused for eval-mode BN.)
        "fc_biases": jnp.zeros((n_fc, 1, hidden), jnp.float32),
    }


# ---------------------------------------------------------------------------
# Pure-JAX reference (true module semantics: linear + bias, train-mode BN, ReLU),
# with the same MXU-native precision (bf16 matmul operands, f32 accumulation / BN).
# ---------------------------------------------------------------------------

def simple_baseline_reference(params, x):
    def one_group(xg):  # (B, F) -> (B, H)
        net = (jnp.dot(xg.astype(jnp.bfloat16), params["w0_t"],
                       preferred_element_type=jnp.float32) + params["b0"])
        layer = 0
        for _ in range(params["num_fc_blocks"]):
            residual = net
            for _ in range(params["num_fcs_per_block"]):
                h = (jnp.dot(net.astype(jnp.bfloat16), params["ws_t"][layer],
                             preferred_element_type=jnp.float32)
                     + params["fc_biases"][layer])
                mean = jnp.mean(h, axis=0, keepdims=True)
                var = jnp.mean((h - mean) ** 2, axis=0, keepdims=True)  # biased batch var
                hn = (h - mean) * jax.lax.rsqrt(var + EPS)
                net = jnp.maximum(params["gammas"][layer] * hn
                                  + params["betas"][layer], 0.0)
                layer += 1
            net = net + residual
        return net
    return jax.vmap(jax.vmap(one_group))(x)


# ---------------------------------------------------------------------------

if __name__ == "__main__":
    # Small, TPU-friendly shapes: hidden=128 (lanes), batch=8 (sublanes) per BN group,
    # 4 groups per tile (32 MXU rows per matmul), 2 grid tiles ("parallel" on v7x).
    num_tiles, groups, batch, feature_dim, hidden = 2, 4, 8, 32, 128
    num_fc_blocks, num_fcs_per_block = 2, 2

    k_param, k_data = jax.random.split(jax.random.PRNGKey(0))
    params = init_simple_baseline(k_param, feature_dim, hidden,
                                  num_fc_blocks, num_fcs_per_block)
    x = jax.random.normal(k_data, (num_tiles, groups, batch, feature_dim), jnp.float32)

    out = jax.block_until_ready(simple_baseline_forward(params, x))
    ref = simple_baseline_reference(params, x)
    np.testing.assert_allclose(np.asarray(out), np.asarray(ref), rtol=1e-4, atol=1e-4)

    # TODO(synk): BatchNorm1d running-mean/running-var buffer updates (a training-only
    # side effect) are not produced; they do not affect the train-mode forward output.
    print("KERNEL_OK")
</pallas_src>

<mosaic_0001>
module attributes {stable_mosaic.version = 11 : i64} {
  func.func @_fused_forward_kernel(%arg0: i32, %arg1: memref<1x4x8x32xf32, #tpu.memory_space<vmem>>, %arg2: memref<32x128xbf16, #tpu.memory_space<vmem>>, %arg3: memref<1x128xf32, #tpu.memory_space<vmem>>, %arg4: memref<4x128x128xbf16, #tpu.memory_space<vmem>>, %arg5: memref<4x1x128xf32, #tpu.memory_space<vmem>>, %arg6: memref<4x1x128xf32, #tpu.memory_space<vmem>>, %arg7: memref<1x4x8x128xf32, #tpu.memory_space<vmem>>) attributes {dimension_semantics = [#tpu.dimension_semantics<parallel>], iteration_bounds = array<i64: 2>, scalar_prefetch = 0 : i64, scratch_operands = 0 : i64, tpu.core_type = #tpu.core_type<tc>, window_params = [{transform_indices = @transform_0, window_bounds = array<i64: 1, 4, 8, 32>}, {pipeline_mode = #tpu.pipeline_mode<synchronous>, transform_indices = @transform_1, window_bounds = array<i64: 32, 128>}, {pipeline_mode = #tpu.pipeline_mode<synchronous>, transform_indices = @transform_2, window_bounds = array<i64: 1, 128>}, {pipeline_mode = #tpu.pipeline_mode<synchronous>, transform_indices = @transform_3, window_bounds = array<i64: 4, 128, 128>}, {pipeline_mode = #tpu.pipeline_mode<synchronous>, transform_indices = @transform_4, window_bounds = array<i64: 4, 1, 128>}, {pipeline_mode = #tpu.pipeline_mode<synchronous>, transform_indices = @transform_5, window_bounds = array<i64: 4, 1, 128>}, {transform_indices = @transform_6, window_bounds = array<i64: 1, 4, 8, 128>}]} {
    %c0 = arith.constant 0 : index
    %c0_0 = arith.constant 0 : index
    %c0_1 = arith.constant 0 : index
    %c0_2 = arith.constant 0 : index
    %0 = vector.load %arg1[%c0, %c0_0, %c0_1, %c0_2] : memref<1x4x8x32xf32, #tpu.memory_space<vmem>>, vector<1x4x8x32xf32>
    %1 = vector.shape_cast %0 : vector<1x4x8x32xf32> to vector<32x32xf32>
    %2 = arith.truncf %1 : vector<32x32xf32> to vector<32x32xbf16>
    %c0_3 = arith.constant 0 : index
    %c0_4 = arith.constant 0 : index
    %3 = vector.load %arg2[%c0_3, %c0_4] : memref<32x128xbf16, #tpu.memory_space<vmem>>, vector<32x128xbf16>
    %cst = arith.constant dense<0.000000e+00> : vector<32x128xf32>
    %4 = tpu.matmul %2, %3, %cst {dimension_numbers = #tpu.dot_dimension_numbers<[1], [0], [0], [1], [0, 0, 1, 1], [], []>} : vector<32x32xbf16>, vector<32x128xbf16>, vector<32x128xf32> -> vector<32x128xf32>
    %c0_5 = arith.constant 0 : index
    %c0_6 = arith.constant 0 : index
    %5 = vector.load %arg3[%c0_5, %c0_6] : memref<1x128xf32, #tpu.memory_space<vmem>>, vector<1x128xf32>
    %6 = vector.broadcast %5 : vector<1x128xf32> to vector<32x128xf32>
    %7 = arith.addf %4, %6 : vector<32x128xf32>
    %8 = arith.truncf %7 : vector<32x128xf32> to vector<32x128xbf16>
    %c0_7 = arith.constant 0 : index
    %c0_8 = arith.constant 0 : index
    %c0_9 = arith.constant 0 : index
    %9 = vector.load %arg4[%c0_7, %c0_8, %c0_9] : memref<4x128x128xbf16, #tpu.memory_space<vmem>>, vector<1x128x128xbf16>
    %10 = vector.shape_cast %9 : vector<1x128x128xbf16> to vector<128x128xbf16>
    %cst_10 = arith.constant dense<0.000000e+00> : vector<32x128xf32>
    %11 = tpu.matmul %8, %10, %cst_10 {dimension_numbers = #tpu.dot_dimension_numbers<[1], [0], [0], [1], [0, 0, 1, 1], [], []>} : vector<32x128xbf16>, vector<128x128xbf16>, vector<32x128xf32> -> vector<32x128xf32>
    %12 = vector.shape_cast %11 : vector<32x128xf32> to vector<4x8x128xf32>
    %cst_11 = arith.constant dense<0.000000e+00> : vector<4x128xf32>
    %13 = vector.multi_reduction <add>, %12, %cst_11 [1] : vector<4x8x128xf32> to vector<4x128xf32>
    %14 = vector.shape_cast %13 : vector<4x128xf32> to vector<4x1x128xf32>
    %cst_12 = arith.constant 1.250000e-01 : f32
    %15 = vector.broadcast %cst_12 : f32 to vector<4x1x128xf32>
    %16 = arith.mulf %14, %15 : vector<4x1x128xf32>
    %17 = vector.broadcast %16 : vector<4x1x128xf32> to vector<4x8x128xf32>
    %18 = arith.subf %12, %17 : vector<4x8x128xf32>
    %19 = arith.mulf %18, %18 : vector<4x8x128xf32>
    %cst_13 = arith.constant dense<0.000000e+00> : vector<4x128xf32>
    %20 = vector.multi_reduction <add>, %19, %cst_13 [1] : vector<4x8x128xf32> to vector<4x128xf32>
    %21 = vector.shape_cast %20 : vector<4x128xf32> to vector<4x1x128xf32>
    %cst_14 = arith.constant 1.250000e-01 : f32
    %22 = vector.broadcast %cst_14 : f32 to vector<4x1x128xf32>
    %23 = arith.mulf %21, %22 : vector<4x1x128xf32>
    %c0_15 = arith.constant 0 : index
    %c0_16 = arith.constant 0 : index
    %c0_17 = arith.constant 0 : index
    %24 = vector.load %arg5[%c0_15, %c0_16, %c0_17] : memref<4x1x128xf32, #tpu.memory_space<vmem>>, vector<1x1x128xf32>
    %25 = vector.shape_cast %24 : vector<1x1x128xf32> to vector<1x128xf32>
    %cst_18 = arith.constant 9.99999974E-6 : f32
    %26 = vector.broadcast %cst_18 : f32 to vector<4x1x128xf32>
    %27 = arith.addf %23, %26 : vector<4x1x128xf32>
    %28 = math.rsqrt %27 : vector<4x1x128xf32>
    %29 = vector.shape_cast %25 : vector<1x128xf32> to vector<1x1x128xf32>
    %30 = vector.broadcast %29 : vector<1x1x128xf32> to vector<4x1x128xf32>
    %31 = arith.mulf %30, %28 : vector<4x1x128xf32>
    %c0_19 = arith.constant 0 : index
    %c0_20 = arith.constant 0 : index
    %c0_21 = arith.constant 0 : index
    %32 = vector.load %arg6[%c0_19, %c0_20, %c0_21] : memref<4x1x128xf32, #tpu.memory_space<vmem>>, vector<1x1x128xf32>
    %33 = vector.shape_cast %32 : vector<1x1x128xf32> to vector<1x128xf32>
    %34 = arith.mulf %16, %31 : vector<4x1x128xf32>
    %35 = vector.shape_cast %33 : vector<1x128xf32> to vector<1x1x128xf32>
    %36 = vector.broadcast %35 : vector<1x1x128xf32> to vector<4x1x128xf32>
    %37 = arith.subf %36, %34 : vector<4x1x128xf32>
    %38 = vector.broadcast %31 : vector<4x1x128xf32> to vector<4x8x128xf32>
    %39 = arith.mulf %12, %38 : vector<4x8x128xf32>
    %40 = vector.broadcast %37 : vector<4x1x128xf32> to vector<4x8x128xf32>
    %41 = arith.addf %39, %40 : vector<4x8x128xf32>
    %cst_22 = arith.constant 0.000000e+00 : f32
    %42 = vector.broadcast %cst_22 : f32 to vector<4x8x128xf32>
    %43 = arith.maximumf %41, %42 : vector<4x8x128xf32>
    %44 = vector.shape_cast %43 : vector<4x8x128xf32> to vector<32x128xf32>
    %45 = arith.truncf %44 : vector<32x128xf32> to vector<32x128xbf16>
    %c1 = arith.constant 1 : index
    %c0_23 = arith.constant 0 : index
    %c0_24 = arith.constant 0 : index
    %46 = vector.load %arg4[%c1, %c0_23, %c0_24] : memref<4x128x128xbf16, #tpu.memory_space<vmem>>, vector<1x128x128xbf16>
    %47 = vector.shape_cast %46 : vector<1x128x128xbf16> to vector<128x128xbf16>
    %cst_25 = arith.constant dense<0.000000e+00> : vector<32x128xf32>
    %48 = tpu.matmul %45, %47, %cst_25 {dimension_numbers = #tpu.dot_dimension_numbers<[1], [0], [0], [1], [0, 0, 1, 1], [], []>} : vector<32x128xbf16>, vector<128x128xbf16>, vector<32x128xf32> -> vector<32x128xf32>
    %49 = vector.shape_cast %48 : vector<32x128xf32> to vector<4x8x128xf32>
    %cst_26 = arith.constant dense<0.000000e+00> : vector<4x128xf32>
    %50 = vector.multi_reduction <add>, %49, %cst_26 [1] : vector<4x8x128xf32> to vector<4x128xf32>
    %51 = vector.shape_cast %50 : vector<4x128xf32> to vector<4x1x128xf32>
    %cst_27 = arith.constant 1.250000e-01 : f32
    %52 = vector.broadcast %cst_27 : f32 to vector<4x1x128xf32>
    %53 = arith.mulf %51, %52 : vector<4x1x128xf32>
    %54 = vector.broadcast %53 : vector<4x1x128xf32> to vector<4x8x128xf32>
    %55 = arith.subf %49, %54 : vector<4x8x128xf32>
    %56 = arith.mulf %55, %55 : vector<4x8x128xf32>
    %cst_28 = arith.constant dense<0.000000e+00> : vector<4x128xf32>
    %57 = vector.multi_reduction <add>, %56, %cst_28 [1] : vector<4x8x128xf32> to vector<4x128xf32>
    %58 = vector.shape_cast %57 : vector<4x128xf32> to vector<4x1x128xf32>
    %cst_29 = arith.constant 1.250000e-01 : f32
    %59 = vector.broadcast %cst_29 : f32 to vector<4x1x128xf32>
    %60 = arith.mulf %58, %59 : vector<4x1x128xf32>
    %c1_30 = arith.constant 1 : index
    %c0_31 = arith.constant 0 : index
    %c0_32 = arith.constant 0 : index
    %61 = vector.load %arg5[%c1_30, %c0_31, %c0_32] : memref<4x1x128xf32, #tpu.memory_space<vmem>>, vector<1x1x128xf32>
    %62 = vector.shape_cast %61 : vector<1x1x128xf32> to vector<1x128xf32>
    %cst_33 = arith.constant 9.99999974E-6 : f32
    %63 = vector.broadcast %cst_33 : f32 to vector<4x1x128xf32>
    %64 = arith.addf %60, %63 : vector<4x1x128xf32>
    %65 = math.rsqrt %64 : vector<4x1x128xf32>
    %66 = vector.shape_cast %62 : vector<1x128xf32> to vector<1x1x128xf32>
    %67 = vector.broadcast %66 : vector<1x1x128xf32> to vector<4x1x128xf32>
    %68 = arith.mulf %67, %65 : vector<4x1x128xf32>
    %c1_34 = arith.constant 1 : index
    %c0_35 = arith.constant 0 : index
    %c0_36 = arith.constant 0 : index
    %69 = vector.load %arg6[%c1_34, %c0_35, %c0_36] : memref<4x1x128xf32, #tpu.memory_space<vmem>>, vector<1x1x128xf32>
    %70 = vector.shape_cast %69 : vector<1x1x128xf32> to vector<1x128xf32>
    %71 = arith.mulf %53, %68 : vector<4x1x128xf32>
    %72 = vector.shape_cast %70 : vector<1x128xf32> to vector<1x1x128xf32>
    %73 = vector.broadcast %72 : vector<1x1x128xf32> to vector<4x1x128xf32>
    %74 = arith.subf %73, %71 : vector<4x1x128xf32>
    %75 = vector.broadcast %68 : vector<4x1x128xf32> to vector<4x8x128xf32>
    %76 = arith.mulf %49, %75 : vector<4x8x128xf32>
    %77 = vector.broadcast %74 : vector<4x1x128xf32> to vector<4x8x128xf32>
    %78 = arith.addf %76, %77 : vector<4x8x128xf32>
    %cst_37 = arith.constant 0.000000e+00 : f32
    %79 = vector.broadcast %cst_37 : f32 to vector<4x8x128xf32>
    %80 = arith.maximumf %78, %79 : vector<4x8x128xf32>
    %81 = vector.shape_cast %80 : vector<4x8x128xf32> to vector<32x128xf32>
    %82 = arith.addf %81, %7 : vector<32x128xf32>
    %83 = arith.truncf %82 : vector<32x128xf32> to vector<32x128xbf16>
    %c2 = arith.constant 2 : index
    %c0_38 = arith.constant 0 : index
    %c0_39 = arith.constant 0 : index
    %84 = vector.load %arg4[%c2, %c0_38, %c0_39] : memref<4x128x128xbf16, #tpu.memory_space<vmem>>, vector<1x128x128xbf16>
    %85 = vector.shape_cast %84 : vector<1x128x128xbf16> to vector<128x128xbf16>
    %cst_40 = arith.constant dense<0.000000e+00> : vector<32x128xf32>
    %86 = tpu.matmul %83, %85, %cst_40 {dimension_numbers = #tpu.dot_dimension_numbers<[1], [0], [0], [1], [0, 0, 1, 1], [], []>} : vector<32x128xbf16>, vector<128x128xbf16>, vector<32x128xf32> -> vector<32x128xf32>
    %87 = vector.shape_cast %86 : vector<32x128xf32> to vector<4x8x128xf32>
    %cst_41 = arith.constant dense<0.000000e+00> : vector<4x128xf32>
    %88 = vector.multi_reduction <add>, %87, %cst_41 [1] : vector<4x8x128xf32> to vector<4x128xf32>
    %89 = vector.shape_cast %88 : vector<4x128xf32> to vector<4x1x128xf32>
    %cst_42 = arith.constant 1.250000e-01 : f32
    %90 = vector.broadcast %cst_42 : f32 to vector<4x1x128xf32>
    %91 = arith.mulf %89, %90 : vector<4x1x128xf32>
    %92 = vector.broadcast %91 : vector<4x1x128xf32> to vector<4x8x128xf32>
    %93 = arith.subf %87, %92 : vector<4x8x128xf32>
    %94 = arith.mulf %93, %93 : vector<4x8x128xf32>
    %cst_43 = arith.constant dense<0.000000e+00> : vector<4x128xf32>
    %95 = vector.multi_reduction <add>, %94, %cst_43 [1] : vector<4x8x128xf32> to vector<4x128xf32>
    %96 = vector.shape_cast %95 : vector<4x128xf32> to vector<4x1x128xf32>
    %cst_44 = arith.constant 1.250000e-01 : f32
    %97 = vector.broadcast %cst_44 : f32 to vector<4x1x128xf32>
    %98 = arith.mulf %96, %97 : vector<4x1x128xf32>
    %c2_45 = arith.constant 2 : index
    %c0_46 = arith.constant 0 : index
    %c0_47 = arith.constant 0 : index
    %99 = vector.load %arg5[%c2_45, %c0_46, %c0_47] : memref<4x1x128xf32, #tpu.memory_space<vmem>>, vector<1x1x128xf32>
    %100 = vector.shape_cast %99 : vector<1x1x128xf32> to vector<1x128xf32>
    %cst_48 = arith.constant 9.99999974E-6 : f32
    %101 = vector.broadcast %cst_48 : f32 to vector<4x1x128xf32>
    %102 = arith.addf %98, %101 : vector<4x1x128xf32>
    %103 = math.rsqrt %102 : vector<4x1x128xf32>
    %104 = vector.shape_cast %100 : vector<1x128xf32> to vector<1x1x128xf32>
    %105 = vector.broadcast %104 : vector<1x1x128xf32> to vector<4x1x128xf32>
    %106 = arith.mulf %105, %103 : vector<4x1x128xf32>
    %c2_49 = arith.constant 2 : index
    %c0_50 = arith.constant 0 : index
    %c0_51 = arith.constant 0 : index
    %107 = vector.load %arg6[%c2_49, %c0_50, %c0_51] : memref<4x1x128xf32, #tpu.memory_space<vmem>>, vector<1x1x128xf32>
    %108 = vector.shape_cast %107 : vector<1x1x128xf32> to vector<1x128xf32>
    %109 = arith.mulf %91, %106 : vector<4x1x128xf32>
    %110 = vector.shape_cast %108 : vector<1x128xf32> to vector<1x1x128xf32>
    %111 = vector.broadcast %110 : vector<1x1x128xf32> to vector<4x1x128xf32>
    %112 = arith.subf %111, %109 : vector<4x1x128xf32>
    %113 = vector.broadcast %106 : vector<4x1x128xf32> to vector<4x8x128xf32>
    %114 = arith.mulf %87, %113 : vector<4x8x128xf32>
    %115 = vector.broadcast %112 : vector<4x1x128xf32> to vector<4x8x128xf32>
    %116 = arith.addf %114, %115 : vector<4x8x128xf32>
    %cst_52 = arith.constant 0.000000e+00 : f32
    %117 = vector.broadcast %cst_52 : f32 to vector<4x8x128xf32>
    %118 = arith.maximumf %116, %117 : vector<4x8x128xf32>
    %119 = vector.shape_cast %118 : vector<4x8x128xf32> to vector<32x128xf32>
    %120 = arith.truncf %119 : vector<32x128xf32> to vector<32x128xbf16>
    %c3 = arith.constant 3 : index
    %c0_53 = arith.constant 0 : index
    %c0_54 = arith.constant 0 : index
    %121 = vector.load %arg4[%c3, %c0_53, %c0_54] : memref<4x128x128xbf16, #tpu.memory_space<vmem>>, vector<1x128x128xbf16>
    %122 = vector.shape_cast %121 : vector<1x128x128xbf16> to vector<128x128xbf16>
    %cst_55 = arith.constant dense<0.000000e+00> : vector<32x128xf32>
    %123 = tpu.matmul %120, %122, %cst_55 {dimension_numbers = #tpu.dot_dimension_numbers<[1], [0], [0], [1], [0, 0, 1, 1], [], []>} : vector<32x128xbf16>, vector<128x128xbf16>, vector<32x128xf32> -> vector<32x128xf32>
    %124 = vector.shape_cast %123 : vector<32x128xf32> to vector<4x8x128xf32>
    %cst_56 = arith.constant dense<0.000000e+00> : vector<4x128xf32>
    %125 = vector.multi_reduction <add>, %124, %cst_56 [1] : vector<4x8x128xf32> to vector<4x128xf32>
    %126 = vector.shape_cast %125 : vector<4x128xf32> to vector<4x1x128xf32>
    %cst_57 = arith.constant 1.250000e-01 : f32
    %127 = vector.broadcast %cst_57 : f32 to vector<4x1x128xf32>
    %128 = arith.mulf %126, %127 : vector<4x1x128xf32>
    %129 = vector.broadcast %128 : vector<4x1x128xf32> to vector<4x8x128xf32>
    %130 = arith.subf %124, %129 : vector<4x8x128xf32>
    %131 = arith.mulf %130, %130 : vector<4x8x128xf32>
    %cst_58 = arith.constant dense<0.000000e+00> : vector<4x128xf32>
    %132 = vector.multi_reduction <add>, %131, %cst_58 [1] : vector<4x8x128xf32> to vector<4x128xf32>
    %133 = vector.shape_cast %132 : vector<4x128xf32> to vector<4x1x128xf32>
    %cst_59 = arith.constant 1.250000e-01 : f32
    %134 = vector.broadcast %cst_59 : f32 to vector<4x1x128xf32>
    %135 = arith.mulf %133, %134 : vector<4x1x128xf32>
    %c3_60 = arith.constant 3 : index
    %c0_61 = arith.constant 0 : index
    %c0_62 = arith.constant 0 : index
    %136 = vector.load %arg5[%c3_60, %c0_61, %c0_62] : memref<4x1x128xf32, #tpu.memory_space<vmem>>, vector<1x1x128xf32>
    %137 = vector.shape_cast %136 : vector<1x1x128xf32> to vector<1x128xf32>
    %cst_63 = arith.constant 9.99999974E-6 : f32
    %138 = vector.broadcast %cst_63 : f32 to vector<4x1x128xf32>
    %139 = arith.addf %135, %138 : vector<4x1x128xf32>
    %140 = math.rsqrt %139 : vector<4x1x128xf32>
    %141 = vector.shape_cast %137 : vector<1x128xf32> to vector<1x1x128xf32>
    %142 = vector.broadcast %141 : vector<1x1x128xf32> to vector<4x1x128xf32>
    %143 = arith.mulf %142, %140 : vector<4x1x128xf32>
    %c3_64 = arith.constant 3 : index
    %c0_65 = arith.constant 0 : index
    %c0_66 = arith.constant 0 : index
    %144 = vector.load %arg6[%c3_64, %c0_65, %c0_66] : memref<4x1x128xf32, #tpu.memory_space<vmem>>, vector<1x1x128xf32>
    %145 = vector.shape_cast %144 : vector<1x1x128xf32> to vector<1x128xf32>
    %146 = arith.mulf %128, %143 : vector<4x1x128xf32>
    %147 = vector.shape_cast %145 : vector<1x128xf32> to vector<1x1x128xf32>
    %148 = vector.broadcast %147 : vector<1x1x128xf32> to vector<4x1x128xf32>
    %149 = arith.subf %148, %146 : vector<4x1x128xf32>
    %150 = vector.broadcast %143 : vector<4x1x128xf32> to vector<4x8x128xf32>
    %151 = arith.mulf %124, %150 : vector<4x8x128xf32>
    %152 = vector.broadcast %149 : vector<4x1x128xf32> to vector<4x8x128xf32>
    %153 = arith.addf %151, %152 : vector<4x8x128xf32>
    %cst_67 = arith.constant 0.000000e+00 : f32
    %154 = vector.broadcast %cst_67 : f32 to vector<4x8x128xf32>
    %155 = arith.maximumf %153, %154 : vector<4x8x128xf32>
    %156 = vector.shape_cast %155 : vector<4x8x128xf32> to vector<32x128xf32>
    %157 = arith.addf %156, %82 : vector<32x128xf32>
    %158 = vector.shape_cast %157 : vector<32x128xf32> to vector<1x4x8x128xf32>
    %c0_68 = arith.constant 0 : index
    %c0_69 = arith.constant 0 : index
    %c0_70 = arith.constant 0 : index
    %c0_71 = arith.constant 0 : index
    %159 = vector.load %arg7[%c0_68, %c0_69, %c0_70, %c0_71] : memref<1x4x8x128xf32, #tpu.memory_space<vmem>>, vector<1x4x8x128xf32>
    tpu.vector_store %arg7[%c0_68, %c0_69, %c0_70, %c0_71], %158 {strides = array<i32>} : memref<1x4x8x128xf32, #tpu.memory_space<vmem>>, vector<1x4x8x128xf32>,
    return
  }
  func.func @transform_0(%arg0: i32) -> (i32, i32, i32, i32) {
    %c0_i32 = arith.constant 0 : i32
    %c0_i32_0 = arith.constant 0 : i32
    %c0_i32_1 = arith.constant 0 : i32
    %c0_i32_2 = arith.constant 0 : i32
    return %arg0, %c0_i32, %c0_i32_0, %c0_i32_1 : i32, i32, i32, i32
  }
  func.func @transform_1(%arg0: i32) -> (i32, i32) {
    %c0_i32 = arith.constant 0 : i32
    %c0_i32_0 = arith.constant 0 : i32
    %c0_i32_1 = arith.constant 0 : i32
    return %c0_i32, %c0_i32_0 : i32, i32
  }
  func.func @transform_2(%arg0: i32) -> (i32, i32) {
    %c0_i32 = arith.constant 0 : i32
    %c0_i32_0 = arith.constant 0 : i32
    %c0_i32_1 = arith.constant 0 : i32
    return %c0_i32, %c0_i32_0 : i32, i32
  }
  func.func @transform_3(%arg0: i32) -> (i32, i32, i32) {
    %c0_i32 = arith.constant 0 : i32
    %c0_i32_0 = arith.constant 0 : i32
    %c0_i32_1 = arith.constant 0 : i32
    %c0_i32_2 = arith.constant 0 : i32
    return %c0_i32, %c0_i32_0, %c0_i32_1 : i32, i32, i32
  }
  func.func @transform_4(%arg0: i32) -> (i32, i32, i32) {
    %c0_i32 = arith.constant 0 : i32
    %c0_i32_0 = arith.constant 0 : i32
    %c0_i32_1 = arith.constant 0 : i32
    %c0_i32_2 = arith.constant 0 : i32
    return %c0_i32, %c0_i32_0, %c0_i32_1 : i32, i32, i32
  }
  func.func @transform_5(%arg0: i32) -> (i32, i32, i32) {
    %c0_i32 = arith.constant 0 : i32
    %c0_i32_0 = arith.constant 0 : i32
    %c0_i32_1 = arith.constant 0 : i32
    %c0_i32_2 = arith.constant 0 : i32
    return %c0_i32, %c0_i32_0, %c0_i32_1 : i32, i32, i32
  }
  func.func @transform_6(%arg0: i32) -> (i32, i32, i32, i32) {
    %c0_i32 = arith.constant 0 : i32
    %c0_i32_0 = arith.constant 0 : i32
    %c0_i32_1 = arith.constant 0 : i32
    %c0_i32_2 = arith.constant 0 : i32
    return %arg0, %c0_i32, %c0_i32_0, %c0_i32_1 : i32, i32, i32, i32
  }
}

</mosaic_0001>

<llo_original>
// kernel: tpu_custom_call.1
$region0: #{tpu_custom_call.1}
  #allocation0 [shape = 'u32[]', space=smem, size = 0x4, offset = 0x4, fixed_abs, tag = 'smem constant byte address 0x4 - core index']
  #allocation1 [shape = 'u32[144,128]{1,0:T(1,128)}', space=vmem, size = 0x12000, scoped, tag = 'internal scratch']
  %s0 = inlined_call_operand.hbm [shape: f32[2,4,8,32], index: 0, kind: input, shape index: {}]
  %s1 = inlined_call_operand.hbm [shape: bf16[32,128], index: 1, kind: input, shape index: {}]
  %s2 = inlined_call_operand.vmem [shape: f32[1,128], index: 2, kind: input, shape index: {}]
  %s3 = inlined_call_operand.hbm [shape: bf16[4,128,128], index: 3, kind: input, shape index: {}]
  %s4 = inlined_call_operand.vmem [shape: f32[4,1,128], index: 4, kind: input, shape index: {}]
  %s5 = inlined_call_operand.vmem [shape: f32[4,1,128], index: 5, kind: input, shape index: {}]
  %s6 = inlined_call_operand.hbm [shape: f32[2,4,8,128], index: 6, kind: output, shape index: {}]
  %s7 = sld [smem:[#allocation0]]
  $region69: #{tpu_custom_call.1} parent=0
    _
  %s9 = ssub.s32 1, %s7
  %s10 = scalar_select 0, %s9, %s7
  $region1: #{tpu_custom_call.1} parent=0
    #allocation2 [shape = 'u8[32768]{0}', space=vmem, size = 0x8000, scoped, tag = 'input window, operand 0']
    #allocation3 [shape = 's32[2]{0}', space=sflag, size = 0x8, scoped, tag = 'scoped memory for tpu_custom_call.1']
    #allocation4 [shape = 's32[2]{0}', space=sflag, size = 0x8, scoped, tag = 'scoped memory for tpu_custom_call.1']
    #allocation5 [shape = 'u8[8192]{0}', space=vmem, size = 0x2000, scoped, tag = 'input window, operand 1, single buffered']
    #allocation6 [shape = 's32[1]{0}', space=sflag, size = 0x4, scoped, tag = 'scoped memory for tpu_custom_call.1']
    #allocation7 [shape = 'u8[131072]{0}', space=vmem, size = 0x20000, scoped, tag = 'input window, operand 3, single buffered']
    #allocation8 [shape = 'u8[32768]{0}', space=vmem, size = 0x8000, scoped, tag = 'output window, operand 0']
    %11 = vsyncpa [#allocation3], 0
    %s12 = scalar_lea.sflag [#allocation3], 1
    %13 = vsyncpa %s12, 0
    %14 = vsyncpa [#allocation6], 0
    %15 = vsyncpa [#allocation4], 0
    %s16 = scalar_lea.sflag [#allocation4], 1
    %17 = vsyncpa %s16, 0
    loop: start=0, step=1, limit=4
    $region2: #{tpu_custom_call.1} parent=1 // loop_pre_header
      _
    $region3: #{tpu_custom_call.1} parent=1 // loop_header
      %s19 = sphi 0, %s23
      %p20 = scmp.ge.s32.totalorder %s19, 4
      %s29 = sphi 0, %s31
      %s32 = sphi 0, %s29
      %s33 = sphi 0, %s32
      %s49 = sphi 0, %s33
      %s53 = sphi 0, %s53
      %s55 = sphi 0, %s53
      %s56 = sphi 0, %s55
      %s70 = sphi 0, %s56
      %s74 = sphi 0, %s74
      %s76 = sphi 0, %s74
      %s77 = sphi 0, %s76
      %s91 = sphi 0, %s77
      %s95 = sphi 0, %s95
      %s97 = sphi 0, %s95
      %s98 = sphi 0, %s97
      %s112 = sphi 0, %s98
      %s116 = sphi 0, %s116
      %s118 = sphi 0, %s116
      %s119 = sphi 0, %s118
      %s133 = sphi 0, %s119
      %s137 = sphi 0, %s137
      %s139 = sphi 0, %s137
      %s140 = sphi 0, %s139
      %s154 = sphi 0, %s140
      %s160 = sphi 0, %s162
      %s163 = sphi 0, %s160
      %s164 = sphi 0, %s163
      %s180 = sphi 0, %s164
    $region4: #{tpu_custom_call.1} parent=1 // loop_header_branch
      %22 = sbr.rel (%p20) target = $region8
    $region5: #{tpu_custom_call.1} parent=1 // loop_body
      %s24 = ssub.s32 %s19, 1
      %s25 = ssub.s32 %s19, 2
      %s26 = sadd.s32 %s19, 1
      %s27 = ssub.s32 %s19, %s26
      %p28 = scmp.eq.s32.totalorder %s27, 0
      %s30 = sadd.s32 %s29, 1
      %s31 = scalar_select %p28, %s29, %s30
      %p34 = pneg %p28
      %p35 = scmp.eq.s32.totalorder %s19, 1
      %p36 = por %p34, %p35
      %p37 = scmp.ne.s32.totalorder %s29, %s32
      %p38 = scmp.eq.s32.totalorder %s19, 0
      %p39 = por %p37, %p38
      %p40 = scmp.ne.s32.totalorder %s29, %s32
      %p41 = scmp.eq.s32.totalorder %s24, 1
      %p42 = por %p40, %p41
      %p43 = scmp.ne.s32.totalorder %s32, %s33
      %p44 = scmp.eq.s32.totalorder %s24, 0
      %p45 = por %p43, %p44
      %p46 = scmp.ne.s32.totalorder %s32, %s33
      %p47 = scmp.eq.s32.totalorder %s25, 1
      %p48 = por %p46, %p47
      %p50 = scmp.ne.s32.totalorder %s33, %s49
      %p51 = scmp.eq.s32.totalorder %s25, 0
      %p52 = por %p50, %p51
      %s54 = sadd.s32 %s53, 1
      %p57 = scmp.eq.s32.totalorder %s19, 1
      %p58 = scmp.ne.s32.totalorder %s53, %s55
      %p59 = scmp.eq.s32.totalorder %s19, 0
      %p60 = por %p58, %p59
      %p61 = scmp.ne.s32.totalorder %s53, %s55
      %p62 = scmp.eq.s32.totalorder %s24, 1
      %p63 = por %p61, %p62
      %p64 = scmp.ne.s32.totalorder %s55, %s56
      %p65 = scmp.eq.s32.totalorder %s24, 0
      %p66 = por %p64, %p65
      %p67 = scmp.ne.s32.totalorder %s55, %s56
      %p68 = scmp.eq.s32.totalorder %s25, 1
      %p69 = por %p67, %p68
      %p71 = scmp.ne.s32.totalorder %s56, %s70
      %p72 = scmp.eq.s32.totalorder %s25, 0
      %p73 = por %p71, %p72
      %s75 = sadd.s32 %s74, 1
      %p78 = scmp.eq.s32.totalorder %s19, 1
      %p79 = scmp.ne.s32.totalorder %s74, %s76
      %p80 = scmp.eq.s32.totalorder %s19, 0
      %p81 = por %p79, %p80
      %p82 = scmp.ne.s32.totalorder %s74, %s76
      %p83 = scmp.eq.s32.totalorder %s24, 1
      %p84 = por %p82, %p83
      %p85 = scmp.ne.s32.totalorder %s76, %s77
      %p86 = scmp.eq.s32.totalorder %s24, 0
      %p87 = por %p85, %p86
      %p88 = scmp.ne.s32.totalorder %s76, %s77
      %p89 = scmp.eq.s32.totalorder %s25, 1
      %p90 = por %p88, %p89
      %p92 = scmp.ne.s32.totalorder %s77, %s91
      %p93 = scmp.eq.s32.totalorder %s25, 0
      %p94 = por %p92, %p93
      %s96 = sadd.s32 %s95, 1
      %p99 = scmp.eq.s32.totalorder %s19, 1
      %p100 = scmp.ne.s32.totalorder %s95, %s97
      %p101 = scmp.eq.s32.totalorder %s19, 0
      %p102 = por %p100, %p101
      %p103 = scmp.ne.s32.totalorder %s95, %s97
      %p104 = scmp.eq.s32.totalorder %s24, 1
      %p105 = por %p103, %p104
      %p106 = scmp.ne.s32.totalorder %s97, %s98
      %p107 = scmp.eq.s32.totalorder %s24, 0
      %p108 = por %p106, %p107
      %p109 = scmp.ne.s32.totalorder %s97, %s98
      %p110 = scmp.eq.s32.totalorder %s25, 1
      %p111 = por %p109, %p110
      %p113 = scmp.ne.s32.totalorder %s98, %s112
      %p114 = scmp.eq.s32.totalorder %s25, 0
      %p115 = por %p113, %p114
      %s117 = sadd.s32 %s116, 1
      %p120 = scmp.eq.s32.totalorder %s19, 1
      %p121 = scmp.ne.s32.totalorder %s116, %s118
      %p122 = scmp.eq.s32.totalorder %s19, 0
      %p123 = por %p121, %p122
      %p124 = scmp.ne.s32.totalorder %s116, %s118
      %p125 = scmp.eq.s32.totalorder %s24, 1
      %p126 = por %p124, %p125
      %p127 = scmp.ne.s32.totalorder %s118, %s119
      %p128 = scmp.eq.s32.totalorder %s24, 0
      %p129 = por %p127, %p128
      %p130 = scmp.ne.s32.totalorder %s118, %s119
      %p131 = scmp.eq.s32.totalorder %s25, 1
      %p132 = por %p130, %p131
      %p134 = scmp.ne.s32.totalorder %s119, %s133
      %p135 = scmp.eq.s32.totalorder %s25, 0
      %p136 = por %p134, %p135
      %s138 = sadd.s32 %s137, 1
      %p141 = scmp.eq.s32.totalorder %s19, 1
      %p142 = scmp.ne.s32.totalorder %s137, %s139
      %p143 = scmp.eq.s32.totalorder %s19, 0
      %p144 = por %p142, %p143
      %p145 = scmp.ne.s32.totalorder %s137, %s139
      %p146 = scmp.eq.s32.totalorder %s24, 1
      %p147 = por %p145, %p146
      %p148 = scmp.ne.s32.totalorder %s139, %s140
      %p149 = scmp.eq.s32.totalorder %s24, 0
      %p150 = por %p148, %p149
      %p151 = scmp.ne.s32.totalorder %s139, %s140
      %p152 = scmp.eq.s32.totalorder %s25, 1
      %p153 = por %p151, %p152
      %p155 = scmp.ne.s32.totalorder %s140, %s154
      %p156 = scmp.eq.s32.totalorder %s25, 0
      %p157 = por %p155, %p156
      %s158 = ssub.s32 %s19, %s26
      %p159 = scmp.eq.s32.totalorder %s158, 0
      %s161 = sadd.s32 %s160, 1
      %s162 = scalar_select %p159, %s160, %s161
      %p165 = pneg %p159
      %p166 = scmp.eq.s32.totalorder %s19, 1
      %p167 = por %p165, %p166
      %p168 = scmp.ne.s32.totalorder %s160, %s163
      %p169 = scmp.eq.s32.totalorder %s19, 0
      %p170 = por %p168, %p169
      %p171 = scmp.ne.s32.totalorder %s160, %s163
      %p172 = scmp.eq.s32.totalorder %s24, 1
      %p173 = por %p171, %p172
      %p174 = scmp.ne.s32.totalorder %s163, %s164
      %p175 = scmp.eq.s32.totalorder %s24, 0
      %p176 = por %p174, %p175
      %p177 = scmp.ne.s32.totalorder %s163, %s164
      %p178 = scmp.eq.s32.totalorder %s25, 1
      %p179 = por %p177, %p178
      %p181 = scmp.ne.s32.totalorder %s164, %s180
      %p182 = scmp.eq.s32.totalorder %s25, 0
      %p183 = por %p181, %p182
      %p184 = scmp.le.s32.totalorder 1, %s19
      %p185 = scmp.lt.s32.totalorder %s19, 3
      %p186 = pnand %p184, %p185
      %p187 = pneg %p186
      // Predicated region
      $region9: #{tpu_custom_call.1} parent=5 // pred_check
        _
      $region10: #{tpu_custom_call.1} parent=5 // pred_check_branch
        %189 = sbr.rel (%p186) target = $region12
      $region11: #{tpu_custom_call.1} parent=5 // pred_region
        %s190 = ssub.s32 %s19, 1
        // Predicated region
        $region13: #{tpu_custom_call.1} parent=11 // pred_check
          %p191 = pneg %p66
        $region14: #{tpu_custom_call.1} parent=11 // pred_check_branch
          %193 = sbr.rel (%p191) target = $region16
        $region15: #{tpu_custom_call.1} parent=11 // pred_region
          %s195 = ssub.s32 256, 256
          %196 = vsyncadd [#allocation6], %s195
          %s197 = sshll.u32 [#allocation5], 4
          %s198 = int_to_ptr.vmem [resolvable:$true] %s197
          %203 = dma.hbm_to_vmem [thread:$0]  %s1, 256, %s198, [#allocation6], 64, 64, 4
        $region16: #{tpu_custom_call.1} parent=11 // pred_fallthru
          _
        // Predicated region
        $region17: #{tpu_custom_call.1} parent=11 // pred_check
          %p204 = pneg %p87
        $region18: #{tpu_custom_call.1} parent=11 // pred_check_branch
          %206 = sbr.rel (%p204) target = $region20
        $region19: #{tpu_custom_call.1} parent=11 // pred_region
          _
        $region20: #{tpu_custom_call.1} parent=11 // pred_fallthru
          _
        // Predicated region
        $region21: #{tpu_custom_call.1} parent=11 // pred_check
          %p207 = pneg %p108
        $region22: #{tpu_custom_call.1} parent=11 // pred_check_branch
          %209 = sbr.rel (%p207) target = $region24
        $region23: #{tpu_custom_call.1} parent=11 // pred_region
          %s211 = ssub.s32 4096, 4096
          %212 = vsyncadd [#allocation6], %s211
          %s213 = sshll.u32 [#allocation7], 4
          %s214 = int_to_ptr.vmem [resolvable:$true] %s213
          %219 = dma.hbm_to_vmem [thread:$0]  %s3, 4096, %s214, [#allocation6], 64, 64, 4
        $region24: #{tpu_custom_call.1} parent=11 // pred_fallthru
          _
        // Predicated region
        $region25: #{tpu_custom_call.1} parent=11 // pred_check
          %p220 = pneg %p129
        $region26: #{tpu_custom_call.1} parent=11 // pred_check_branch
          %222 = sbr.rel (%p220) target = $region28
        $region27: #{tpu_custom_call.1} parent=11 // pred_region
          _
        $region28: #{tpu_custom_call.1} parent=11 // pred_fallthru
          _
        // Predicated region
        $region29: #{tpu_custom_call.1} parent=11 // pred_check
          %p223 = pneg %p150
        $region30: #{tpu_custom_call.1} parent=11 // pred_check_branch
          %225 = sbr.rel (%p223) target = $region32
        $region31: #{tpu_custom_call.1} parent=11 // pred_region
          _
        $region32: #{tpu_custom_call.1} parent=11 // pred_fallthru
          _
      $region12: #{tpu_custom_call.1} parent=5 // pred_fallthru
        _
      %p226 = scmp.lt.s32.totalorder %s19, 2
      // Predicated region
      $region33: #{tpu_custom_call.1} parent=5 // pred_check
        %p227 = pneg %p226
      $region34: #{tpu_custom_call.1} parent=5 // pred_check_branch
        %229 = sbr.rel (%p227) target = $region36
      $region35: #{tpu_custom_call.1} parent=5 // pred_region
        // Predicated region
        $region37: #{tpu_custom_call.1} parent=35 // pred_check
          %p230 = pneg %p39
        $region38: #{tpu_custom_call.1} parent=35 // pred_check_branch
          %232 = sbr.rel (%p230) target = $region40
        $region39: #{tpu_custom_call.1} parent=35 // pred_region
          %s233 = sand.u32 %s29, 1
          %s234 = scalar_lea.sflag [#allocation3], %s233
          %s235 = sand.u32 %s29, 1
          %s236 = smul.addr %s235, 32
          %s237 = scalar_lea.vmem [#allocation2], %s236
          %s239 = ssub.s32 512, 512
          %240 = vsyncadd %s234, %s239
          %s241 = smul.addr %s19, 4
          %s242 = smul.addr %s241, 128
          %s243 = scalar_lea.hbm %s0, %s242
          %s244 = sshll.u32 %s237, 4
          %s245 = int_to_ptr.vmem [resolvable:$true] %s244
          %250 = dma.hbm_to_vmem [thread:$0]  %s243, 512, %s245, %s234, 128, 128, 8
        $region40: #{tpu_custom_call.1} parent=35 // pred_fallthru
          _
      $region36: #{tpu_custom_call.1} parent=5 // pred_fallthru
        _
      %p251 = scmp.le.s32.totalorder 1, %s19
      %p252 = scmp.lt.s32.totalorder %s19, 3
      %p253 = pnand %p251, %p252
      %p254 = pneg %p253
      // Predicated region
      $region41: #{tpu_custom_call.1} parent=5 // pred_check
        _
      $region42: #{tpu_custom_call.1} parent=5 // pred_check_branch
        %256 = sbr.rel (%p253) target = $region44
      $region43: #{tpu_custom_call.1} parent=5 // pred_region
        %s257 = ssub.s32 %s19, 1
        %s258 = sand.u32 %s32, 1
        %s259 = scalar_lea.sflag [#allocation3], %s258
        %s260 = sand.u32 %s32, 1
        %s261 = smul.addr %s260, 32
        %s262 = scalar_lea.vmem [#allocation2], %s261
        // Predicated region
        $region45: #{tpu_custom_call.1} parent=43 // pred_check
          %p263 = pneg %p45
        $region46: #{tpu_custom_call.1} parent=43 // pred_check_branch
          %265 = sbr.rel (%p263) target = $region48
        $region47: #{tpu_custom_call.1} parent=43 // pred_region
          %266 = dma.done %s259, 512
        $region48: #{tpu_custom_call.1} parent=43 // pred_fallthru
          _
        // Predicated region
        $region49: #{tpu_custom_call.1} parent=43 // pred_check
          %p267 = pneg %p66
        $region50: #{tpu_custom_call.1} parent=43 // pred_check_branch
          %269 = sbr.rel (%p267) target = $region52
        $region51: #{tpu_custom_call.1} parent=43 // pred_region
          %270 = dma.done [#allocation6], 256
        $region52: #{tpu_custom_call.1} parent=43 // pred_fallthru
          _
        // Predicated region
        $region53: #{tpu_custom_call.1} parent=43 // pred_check
          %p271 = pneg %p108
        $region54: #{tpu_custom_call.1} parent=43 // pred_check_branch
          %273 = sbr.rel (%p271) target = $region56
        $region55: #{tpu_custom_call.1} parent=43 // pred_region
          %274 = dma.done [#allocation6], 4096
        $region56: #{tpu_custom_call.1} parent=43 // pred_fallthru
          _
        %s275 = sand.u32 %s32, 1
        %s276 = scalar_lea.sflag [#allocation3], %s275
        %s277 = sand.u32 %s32, 1
        %s278 = smul.addr %s277, 32
        %s279 = scalar_lea.vmem [#allocation2], %s278
        %p280 = pneg %p45
        %p281 = pneg %p42
        %p282 = pneg %p66
        %p283 = pneg %p63
        %p284 = pneg %p87
        %p285 = pneg %p84
        %p286 = pneg %p108
        %p287 = pneg %p105
        %p288 = pneg %p129
        %p289 = pneg %p126
        %p290 = pneg %p150
        %p291 = pneg %p147
        %p292 = pneg %p176
        %p293 = pneg %p173
        %s294 = sand.u32 %s163, 1
        %s295 = scalar_lea.sflag [#allocation4], %s294
        %s296 = sand.u32 %s163, 1
        %s297 = smul.addr %s296, 32
        %s298 = scalar_lea.vmem [#allocation8], %s297
        %v300 = vld [vmem:[%s262] sm:$0xff]
        %v301 = vld [vmem:[%s262 + $0x8] sm:$0xff]
        %v302 = vld [vmem:[%s262 + $0x10] sm:$0xff]
        %v303 = vld [vmem:[%s262 + $0x18] sm:$0xff]
        %v304 = vpack.c.bf16 %v301, %v300
        %v305 = vpack.c.bf16 %v303, %v302
        %v306 = vld [vmem:[#allocation5] sm:$0xf]
        %v307 = vld [vmem:[#allocation5 + $0x4] sm:$0xf]
        %v308 = vld [vmem:[#allocation5 + $0x8] sm:$0xf]
        %v309 = vld [vmem:[#allocation5 + $0xc] sm:$0xf]
        %v310 = vld [vmem:[%s2] sm:$0x1]
        %v312 = vlaneseq
        %v313 = vshrl.u32 %v312, 7
        %v314 = vsub.s32 0, %v313
        %v315 = vrot.slane %v310, %v314
        %v321 = vunpack.c.l.b16 %v306
        %v322 = vunpack.c.l.b16 %v307
        %v323 = vunpack.c.l.b16 %v308
        %v324 = vunpack.c.l.b16 %v309
        %v325 = vpack.c.b16 %v322, %v321
        %v326 = vpack.c.b16 %v324, %v323
        %vm329 = vcmask 261120
        %v331 = vsel %vm329, %v304, 0
        %v334 = vsel %vm329, %v305, 0
        %336 = vmatprep.subr.bf16.mxu0 0
        %337 = vmatpush1.bf16.msra.mxu0 %v325
        %338 = vmatprep.subr.bf16.mxu0 0
        %339 = vmatpush1.bf16.msra.mxu0 %v326
        %340 = vmatprep.subr.bf16.mxu0 0
        %341 = vmatpush1.bf16.msra.mxu0 0
        %342 = vmatprep.subr.bf16.mxu0 0
        %343 = vmatpush1.bf16.msra.mxu0 0
        %344 = vmatprep.subr.bf16.mxu0 0
        %345 = vmatpush1.bf16.msra.mxu0 0
        %346 = vmatprep.subr.bf16.mxu0 0
        %347 = vmatpush1.bf16.msra.mxu0 0
        %348 = vmatprep.subr.bf16.mxu0 0
        %349 = vmatpush1.bf16.msra.mxu0 0
        %350 = vmatprep.subr.bf16.mxu0 0
        %351 = vmatpush1.bf16.msra.mxu0 0
        %352 = vmatprep.subr.bf16.mxu0 0
        %353 = vmatpush1.bf16.msra.mxu0 0
        %354 = vmatprep.subr.bf16.mxu0 0
        %355 = vmatpush1.bf16.msra.mxu0 0
        %356 = vmatprep.subr.bf16.mxu0 0
        %357 = vmatpush1.bf16.msra.mxu0 0
        %358 = vmatprep.subr.bf16.mxu0 0
        %359 = vmatpush1.bf16.msra.mxu0 0
        %360 = vmatprep.subr.bf16.mxu0 0
        %361 = vmatpush1.bf16.msra.mxu0 0
        %362 = vmatprep.subr.bf16.mxu0 0
        %363 = vmatpush1.bf16.msra.mxu0 0
        %364 = vmatprep.subr.bf16.mxu0 0
        %365 = vmatpush1.bf16.msra.mxu0 0
        %366 = vmatprep.subr.bf16.mxu0 0
        %367 = vmatpush1.bf16.msra.mxu0 0
        %368 = vmatprep.mubr.bf16.mxu0 0
        %369 = vmatmul.mubr.bf16.gmra.mrb[0].mxu0 %v331
        %v370 = vpop.f32.mrb[0].mxu0
        %v371 = vadd.f32 %v315, %v370
        %v372 = vpop.f32.mrb[0].mxu0
        %v373 = vpop.f32.mrb[0].mxu0
        %v374 = vadd.f32 %v315, %v373
        %v375 = vpop.f32.mrb[0].mxu0
        %376 = vmatprep.mubr.bf16.mxu0 0
        %377 = vmatmul.mubr.bf16.gmra.mrb[0].mxu0 %v334
        %v378 = vpop.f32.mrb[0].mxu0
        %v379 = vadd.f32 %v315, %v378
        %v380 = vpop.f32.mrb[0].mxu0
        %v381 = vpop.f32.mrb[0].mxu0
        %v382 = vadd.f32 %v315, %v381
        %v383 = vpop.f32.mrb[0].mxu0
        %384 = vdwg.mxu0
        %v385 = vpack.c.bf16 %v374, %v371
        %v386 = vpack.c.bf16 %v382, %v379
        %v387 = vld [vmem:[#allocation7] sm:$0xf]
        %v388 = vld [vmem:[#allocation7 + $0x4] sm:$0xf]
        %v389 = vld [vmem:[#allocation7 + $0x8] sm:$0xf]
        %v390 = vld [vmem:[#allocation7 + $0xc] sm:$0xf]
        %v391 = vld [vmem:[#allocation7 + $0x10] sm:$0xf]
        %v392 = vld [vmem:[#allocation7 + $0x14] sm:$0xf]
        %v393 = vld [vmem:[#allocation7 + $0x18] sm:$0xf]
        %v394 = vld [vmem:[#allocation7 + $0x1c] sm:$0xf]
        %v395 = vld [vmem:[#allocation7 + $0x20] sm:$0xf]
        %v396 = vld [vmem:[#allocation7 + $0x24] sm:$0xf]
        %v397 = vld [vmem:[#allocation7 + $0x28] sm:$0xf]
        %v398 = vld [vmem:[#allocation7 + $0x2c] sm:$0xf]
        %v399 = vld [vmem:[#allocation7 + $0x30] sm:$0xf]
        %v400 = vld [vmem:[#allocation7 + $0x34] sm:$0xf]
        %v401 = vld [vmem:[#allocation7 + $0x38] sm:$0xf]
        %v402 = vld [vmem:[#allocation7 + $0x3c] sm:$0xf]
        %v419 = vunpack.c.l.b16 %v387
        %v420 = vunpack.c.l.b16 %v388
        %v421 = vunpack.c.l.b16 %v389
        %v422 = vunpack.c.l.b16 %v390
        %v423 = vunpack.c.l.b16 %v391
        %v424 = vunpack.c.l.b16 %v392
        %v425 = vunpack.c.l.b16 %v393
        %v426 = vunpack.c.l.b16 %v394
        %v427 = vunpack.c.l.b16 %v395
        %v428 = vunpack.c.l.b16 %v396
        %v429 = vunpack.c.l.b16 %v397
        %v430 = vunpack.c.l.b16 %v398
        %v431 = vunpack.c.l.b16 %v399
        %v432 = vunpack.c.l.b16 %v400
        %v433 = vunpack.c.l.b16 %v401
        %v434 = vunpack.c.l.b16 %v402
        %v435 = vpack.c.b16 %v420, %v419
        %v436 = vpack.c.b16 %v422, %v421
        %v437 = vpack.c.b16 %v424, %v423
        %v438 = vpack.c.b16 %v426, %v425
        %v439 = vpack.c.b16 %v428, %v427
        %v440 = vpack.c.b16 %v430, %v429
        %v441 = vpack.c.b16 %v432, %v431
        %v442 = vpack.c.b16 %v434, %v433
        %451 = vmatprep.subr.bf16.mxu0 0
        %452 = vmatpush1.bf16.msra.mxu0 %v435
        %453 = vmatprep.subr.bf16.mxu0 0
        %454 = vmatpush1.bf16.msra.mxu0 %v436
        %455 = vmatprep.subr.bf16.mxu0 0
        %456 = vmatpush1.bf16.msra.mxu0 %v437
        %457 = vmatprep.subr.bf16.mxu0 0
        %458 = vmatpush1.bf16.msra.mxu0 %v438
        %459 = vmatprep.subr.bf16.mxu0 0
        %460 = vmatpush1.bf16.msra.mxu0 %v439
        %461 = vmatprep.subr.bf16.mxu0 0
        %462 = vmatpush1.bf16.msra.mxu0 %v440
        %463 = vmatprep.subr.bf16.mxu0 0
        %464 = vmatpush1.bf16.msra.mxu0 %v441
        %465 = vmatprep.subr.bf16.mxu0 0
        %466 = vmatpush1.bf16.msra.mxu0 %v442
        %467 = vmatprep.subr.bf16.mxu0 0
        %468 = vmatpush1.bf16.msra.mxu0 0
        %469 = vmatprep.subr.bf16.mxu0 0
        %470 = vmatpush1.bf16.msra.mxu0 0
        %471 = vmatprep.subr.bf16.mxu0 0
        %472 = vmatpush1.bf16.msra.mxu0 0
        %473 = vmatprep.subr.bf16.mxu0 0
        %474 = vmatpush1.bf16.msra.mxu0 0
        %475 = vmatprep.subr.bf16.mxu0 0
        %476 = vmatpush1.bf16.msra.mxu0 0
        %477 = vmatprep.subr.bf16.mxu0 0
        %478 = vmatpush1.bf16.msra.mxu0 0
        %479 = vmatprep.subr.bf16.mxu0 0
        %480 = vmatpush1.bf16.msra.mxu0 0
        %481 = vmatprep.subr.bf16.mxu0 0
        %482 = vmatpush1.bf16.msra.mxu0 0
        %483 = vmatprep.mubr.bf16.mxu0 0
        %484 = vmatmul.mubr.bf16.gmra.mrb[0].mxu0 %v385
        %v485 = vpop.f32.mrb[0].mxu0
        %v486 = vadd.f32 0.0, %v485
        %v487 = vpop.f32.mrb[0].mxu0
        %v488 = vpop.f32.mrb[0].mxu0
        %v489 = vadd.f32 0.0, %v488
        %v490 = vpop.f32.mrb[0].mxu0
        %491 = vmatprep.mubr.bf16.mxu0 0
        %492 = vmatmul.mubr.bf16.gmra.mrb[0].mxu0 %v386
        %v493 = vpop.f32.mrb[0].mxu0
        %v494 = vadd.f32 0.0, %v493
        %v495 = vpop.f32.mrb[0].mxu0
        %v496 = vpop.f32.mrb[0].mxu0
        %v497 = vadd.f32 0.0, %v496
        %v498 = vpop.f32.mrb[0].mxu0
        %499 = vdwg.mxu0
        %v500 = vrot.slane %v486, 4
        %v501 = vadd.f32 %v486, %v500
        %v502 = vrot.slane %v501, 2
        %v503 = vadd.f32 %v501, %v502
        %v504 = vrot.slane %v503, 1
        %v505 = vadd.f32 %v503, %v504
        %v506 = vrot.slane %v489, 4
        %v507 = vadd.f32 %v489, %v506
        %v508 = vrot.slane %v507, 2
        %v509 = vadd.f32 %v507, %v508
        %v510 = vrot.slane %v509, 1
        %v511 = vadd.f32 %v509, %v510
        %v512 = vrot.slane %v494, 4
        %v513 = vadd.f32 %v494, %v512
        %v514 = vrot.slane %v513, 2
        %v515 = vadd.f32 %v513, %v514
        %v516 = vrot.slane %v515, 1
        %v517 = vadd.f32 %v515, %v516
        %v518 = vrot.slane %v497, 4
        %v519 = vadd.f32 %v497, %v518
        %v520 = vrot.slane %v519, 2
        %v521 = vadd.f32 %v519, %v520
        %v522 = vrot.slane %v521, 1
        %v523 = vadd.f32 %v521, %v522
        %v524 = vmul.f32 %v505, 0.125
        %v525 = vmul.f32 %v511, 0.125
        %v526 = vmul.f32 %v517, 0.125
        %v527 = vmul.f32 %v523, 0.125
        %v528 = vsub.f32 %v486, %v524
        %v529 = vsub.f32 %v489, %v525
        %v530 = vsub.f32 %v494, %v526
        %v531 = vsub.f32 %v497, %v527
        %v532 = vmul.f32 %v528, %v528
        %v533 = vmul.f32 %v529, %v529
        %v534 = vmul.f32 %v530, %v530
        %v535 = vmul.f32 %v531, %v531
        %v536 = vrot.slane %v532, 4
        %v537 = vadd.f32 %v532, %v536
        %v538 = vrot.slane %v537, 2
        %v539 = vadd.f32 %v537, %v538
        %v540 = vrot.slane %v539, 1
        %v541 = vadd.f32 %v539, %v540
        %v542 = vrot.slane %v533, 4
        %v543 = vadd.f32 %v533, %v542
        %v544 = vrot.slane %v543, 2
        %v545 = vadd.f32 %v543, %v544
        %v546 = vrot.slane %v545, 1
        %v547 = vadd.f32 %v545, %v546
        %v548 = vrot.slane %v534, 4
        %v549 = vadd.f32 %v534, %v548
        %v550 = vrot.slane %v549, 2
        %v551 = vadd.f32 %v549, %v550
        %v552 = vrot.slane %v551, 1
        %v553 = vadd.f32 %v551, %v552
        %v554 = vrot.slane %v535, 4
        %v555 = vadd.f32 %v535, %v554
        %v556 = vrot.slane %v555, 2
        %v557 = vadd.f32 %v555, %v556
        %v558 = vrot.slane %v557, 1
        %v559 = vadd.f32 %v557, %v558
        %v560 = vmul.f32 %v541, 0.125
        %v561 = vmul.f32 %v547, 0.125
        %v562 = vmul.f32 %v553, 0.125
        %v563 = vmul.f32 %v559, 0.125
        %v564 = vld [vmem:[%s4] sm:$0x1]
        %v565 = vadd.f32 %v560, 1e-05
        %v566 = vadd.f32 %v561, 1e-05
        %v567 = vadd.f32 %v562, 1e-05
        %v568 = vadd.f32 %v563, 1e-05
        %v569 = vrsqrt.pop %v565
        %v570 = vrsqrt.pop %v566
        %v571 = vrsqrt.pop %v567
        %v572 = vrsqrt.pop %v568
        %v573 = vmul.f32 %v564, %v569
        %v574 = vmul.f32 %v564, %v570
        %v575 = vmul.f32 %v564, %v571
        %v576 = vmul.f32 %v564, %v572
        %v577 = vld [vmem:[%s5] sm:$0x1]
        %v578 = vmul.f32 %v524, %v573
        %v579 = vmul.f32 %v525, %v574
        %v580 = vmul.f32 %v526, %v575
        %v581 = vmul.f32 %v527, %v576
        %v582 = vsub.f32 %v577, %v578
        %v583 = vsub.f32 %v577, %v579
        %v584 = vsub.f32 %v577, %v580
        %v585 = vsub.f32 %v577, %v581
        %v590 = vlaneseq
        %v591 = vshrl.u32 %v590, 7
        %v592 = vsub.s32 0, %v591
        %v593 = vrot.slane %v573, %v592
        %v594 = vlaneseq
        %v595 = vshrl.u32 %v594, 7
        %v596 = vsub.s32 0, %v595
        %v597 = vrot.slane %v574, %v596
        %v598 = vlaneseq
        %v599 = vshrl.u32 %v598, 7
        %v600 = vsub.s32 0, %v599
        %v601 = vrot.slane %v575, %v600
        %v602 = vlaneseq
        %v603 = vshrl.u32 %v602, 7
        %v604 = vsub.s32 0, %v603
        %v605 = vrot.slane %v576, %v604
        %v610 = vmul.f32 %v486, %v593
        %v611 = vmul.f32 %v489, %v597
        %v612 = vmul.f32 %v494, %v601
        %v613 = vmul.f32 %v497, %v605
        %v618 = vlaneseq
        %v619 = vshrl.u32 %v618, 7
        %v620 = vsub.s32 0, %v619
        %v621 = vrot.slane %v582, %v620
        %v622 = vlaneseq
        %v623 = vshrl.u32 %v622, 7
        %v624 = vsub.s32 0, %v623
        %v625 = vrot.slane %v583, %v624
        %v626 = vlaneseq
        %v627 = vshrl.u32 %v626, 7
        %v628 = vsub.s32 0, %v627
        %v629 = vrot.slane %v584, %v628
        %v630 = vlaneseq
        %v631 = vshrl.u32 %v630, 7
        %v632 = vsub.s32 0, %v631
        %v633 = vrot.slane %v585, %v632
        %v638 = vadd.f32 %v610, %v621
        %v639 = vadd.f32 %v611, %v625
        %v640 = vadd.f32 %v612, %v629
        %v641 = vadd.f32 %v613, %v633
        %v642 = vmax.f32 %v638, 0.0
        %v643 = vmax.f32 %v639, 0.0
        %v644 = vmax.f32 %v640, 0.0
        %v645 = vmax.f32 %v641, 0.0
        %v646 = vpack.c.bf16 %v643, %v642
        %v647 = vpack.c.bf16 %v645, %v644
        %s648 = scalar_lea.vmem [#allocation7], 64
        %v649 = vld [vmem:[%s648] sm:$0xf]
        %v650 = vld [vmem:[%s648 + $0x4] sm:$0xf]
        %v651 = vld [vmem:[%s648 + $0x8] sm:$0xf]
        %v652 = vld [vmem:[%s648 + $0xc] sm:$0xf]
        %v653 = vld [vmem:[%s648 + $0x10] sm:$0xf]
        %v654 = vld [vmem:[%s648 + $0x14] sm:$0xf]
        %v655 = vld [vmem:[%s648 + $0x18] sm:$0xf]
        %v656 = vld [vmem:[%s648 + $0x1c] sm:$0xf]
        %v657 = vld [vmem:[%s648 + $0x20] sm:$0xf]
        %v658 = vld [vmem:[%s648 + $0x24] sm:$0xf]
        %v659 = vld [vmem:[%s648 + $0x28] sm:$0xf]
        %v660 = vld [vmem:[%s648 + $0x2c] sm:$0xf]
        %v661 = vld [vmem:[%s648 + $0x30] sm:$0xf]
        %v662 = vld [vmem:[%s648 + $0x34] sm:$0xf]
        %v663 = vld [vmem:[%s648 + $0x38] sm:$0xf]
        %v664 = vld [vmem:[%s648 + $0x3c] sm:$0xf]
        %v681 = vunpack.c.l.b16 %v649
        %v682 = vunpack.c.l.b16 %v650
        %v683 = vunpack.c.l.b16 %v651
        %v684 = vunpack.c.l.b16 %v652
        %v685 = vunpack.c.l.b16 %v653
        %v686 = vunpack.c.l.b16 %v654
        %v687 = vunpack.c.l.b16 %v655
        %v688 = vunpack.c.l.b16 %v656
        %v689 = vunpack.c.l.b16 %v657
        %v690 = vunpack.c.l.b16 %v658
        %v691 = vunpack.c.l.b16 %v659
        %v692 = vunpack.c.l.b16 %v660
        %v693 = vunpack.c.l.b16 %v661
        %v694 = vunpack.c.l.b16 %v662
        %v695 = vunpack.c.l.b16 %v663
        %v696 = vunpack.c.l.b16 %v664
        %v697 = vpack.c.b16 %v682, %v681
        %v698 = vpack.c.b16 %v684, %v683
        %v699 = vpack.c.b16 %v686, %v685
        %v700 = vpack.c.b16 %v688, %v687
        %v701 = vpack.c.b16 %v690, %v689
        %v702 = vpack.c.b16 %v692, %v691
        %v703 = vpack.c.b16 %v694, %v693
        %v704 = vpack.c.b16 %v696, %v695
        %713 = vmatprep.subr.bf16.mxu0 0
        %714 = vmatpush1.bf16.msra.mxu0 %v697
        %715 = vmatprep.subr.bf16.mxu0 0
        %716 = vmatpush1.bf16.msra.mxu0 %v698
        %717 = vmatprep.subr.bf16.mxu0 0
        %718 = vmatpush1.bf16.msra.mxu0 %v699
        %719 = vmatprep.subr.bf16.mxu0 0
        %720 = vmatpush1.bf16.msra.mxu0 %v700
        %721 = vmatprep.subr.bf16.mxu0 0
        %722 = vmatpush1.bf16.msra.mxu0 %v701
        %723 = vmatprep.subr.bf16.mxu0 0
        %724 = vmatpush1.bf16.msra.mxu0 %v702
        %725 = vmatprep.subr.bf16.mxu0 0
        %726 = vmatpush1.bf16.msra.mxu0 %v703
        %727 = vmatprep.subr.bf16.mxu0 0
        %728 = vmatpush1.bf16.msra.mxu0 %v704
        %729 = vmatprep.subr.bf16.mxu0 0
        %730 = vmatpush1.bf16.msra.mxu0 0
        %731 = vmatprep.subr.bf16.mxu0 0
        %732 = vmatpush1.bf16.msra.mxu0 0
        %733 = vmatprep.subr.bf16.mxu0 0
        %734 = vmatpush1.bf16.msra.mxu0 0
        %735 = vmatprep.subr.bf16.mxu0 0
        %736 = vmatpush1.bf16.msra.mxu0 0
        %737 = vmatprep.subr.bf16.mxu0 0
        %738 = vmatpush1.bf16.msra.mxu0 0
        %739 = vmatprep.subr.bf16.mxu0 0
        %740 = vmatpush1.bf16.msra.mxu0 0
        %741 = vmatprep.subr.bf16.mxu0 0
        %742 = vmatpush1.bf16.msra.mxu0 0
        %743 = vmatprep.subr.bf16.mxu0 0
        %744 = vmatpush1.bf16.msra.mxu0 0
        %745 = vmatprep.mubr.bf16.mxu0 0
        %746 = vmatmul.mubr.bf16.gmra.mrb[0].mxu0 %v646
        %v747 = vpop.f32.mrb[0].mxu0
        %v748 = vadd.f32 0.0, %v747
        %v749 = vpop.f32.mrb[0].mxu0
        %v750 = vpop.f32.mrb[0].mxu0
        %v751 = vadd.f32 0.0, %v750
        %v752 = vpop.f32.mrb[0].mxu0
        %753 = vmatprep.mubr.bf16.mxu0 0
        %754 = vmatmul.mubr.bf16.gmra.mrb[0].mxu0 %v647
        %v755 = vpop.f32.mrb[0].mxu0
        %v756 = vadd.f32 0.0, %v755
        %v757 = vpop.f32.mrb[0].mxu0
        %v758 = vpop.f32.mrb[0].mxu0
        %v759 = vadd.f32 0.0, %v758
        %v760 = vpop.f32.mrb[0].mxu0
        %761 = vdwg.mxu0
        %v762 = vrot.slane %v748, 4
        %v763 = vadd.f32 %v748, %v762
        %v764 = vrot.slane %v763, 2
        %v765 = vadd.f32 %v763, %v764
        %v766 = vrot.slane %v765, 1
        %v767 = vadd.f32 %v765, %v766
        %v768 = vrot.slane %v751, 4
        %v769 = vadd.f32 %v751, %v768
        %v770 = vrot.slane %v769, 2
        %v771 = vadd.f32 %v769, %v770
        %v772 = vrot.slane %v771, 1
        %v773 = vadd.f32 %v771, %v772
        %v774 = vrot.slane %v756, 4
        %v775 = vadd.f32 %v756, %v774
        %v776 = vrot.slane %v775, 2
        %v777 = vadd.f32 %v775, %v776
        %v778 = vrot.slane %v777, 1
        %v779 = vadd.f32 %v777, %v778
        %v780 = vrot.slane %v759, 4
        %v781 = vadd.f32 %v759, %v780
        %v782 = vrot.slane %v781, 2
        %v783 = vadd.f32 %v781, %v782
        %v784 = vrot.slane %v783, 1
        %v785 = vadd.f32 %v783, %v784
        %v786 = vmul.f32 %v767, 0.125
        %v787 = vmul.f32 %v773, 0.125
        %v788 = vmul.f32 %v779, 0.125
        %v789 = vmul.f32 %v785, 0.125
        %v790 = vsub.f32 %v748, %v786
        %v791 = vsub.f32 %v751, %v787
        %v792 = vsub.f32 %v756, %v788
        %v793 = vsub.f32 %v759, %v789
        %v794 = vmul.f32 %v790, %v790
        %v795 = vmul.f32 %v791, %v791
        %v796 = vmul.f32 %v792, %v792
        %v797 = vmul.f32 %v793, %v793
        %v798 = vrot.slane %v794, 4
        %v799 = vadd.f32 %v794, %v798
        %v800 = vrot.slane %v799, 2
        %v801 = vadd.f32 %v799, %v800
        %v802 = vrot.slane %v801, 1
        %v803 = vadd.f32 %v801, %v802
        %v804 = vrot.slane %v795, 4
        %v805 = vadd.f32 %v795, %v804
        %v806 = vrot.slane %v805, 2
        %v807 = vadd.f32 %v805, %v806
        %v808 = vrot.slane %v807, 1
        %v809 = vadd.f32 %v807, %v808
        %v810 = vrot.slane %v796, 4
        %v811 = vadd.f32 %v796, %v810
        %v812 = vrot.slane %v811, 2
        %v813 = vadd.f32 %v811, %v812
        %v814 = vrot.slane %v813, 1
        %v815 = vadd.f32 %v813, %v814
        %v816 = vrot.slane %v797, 4
        %v817 = vadd.f32 %v797, %v816
        %v818 = vrot.slane %v817, 2
        %v819 = vadd.f32 %v817, %v818
        %v820 = vrot.slane %v819, 1
        %v821 = vadd.f32 %v819, %v820
        %v822 = vmul.f32 %v803, 0.125
        %v823 = vmul.f32 %v809, 0.125
        %v824 = vmul.f32 %v815, 0.125
        %v825 = vmul.f32 %v821, 0.125
        %s826 = scalar_lea.vmem %s4, 1
        %v827 = vld [vmem:[%s826] sm:$0x1]
        %v828 = vadd.f32 %v822, 1e-05
        %v829 = vadd.f32 %v823, 1e-05
        %v830 = vadd.f32 %v824, 1e-05
        %v831 = vadd.f32 %v825, 1e-05
        %v832 = vrsqrt.pop %v828
        %v833 = vrsqrt.pop %v829
        %v834 = vrsqrt.pop %v830
        %v835 = vrsqrt.pop %v831
        %v836 = vmul.f32 %v827, %v832
        %v837 = vmul.f32 %v827, %v833
        %v838 = vmul.f32 %v827, %v834
        %v839 = vmul.f32 %v827, %v835
        %s840 = scalar_lea.vmem %s5, 1
        %v841 = vld [vmem:[%s840] sm:$0x1]
        %v842 = vmul.f32 %v786, %v836
        %v843 = vmul.f32 %v787, %v837
        %v844 = vmul.f32 %v788, %v838
        %v845 = vmul.f32 %v789, %v839
        %v846 = vsub.f32 %v841, %v842
        %v847 = vsub.f32 %v841, %v843
        %v848 = vsub.f32 %v841, %v844
        %v849 = vsub.f32 %v841, %v845
        %v854 = vlaneseq
        %v855 = vshrl.u32 %v854, 7
        %v856 = vsub.s32 0, %v855
        %v857 = vrot.slane %v836, %v856
        %v858 = vlaneseq
        %v859 = vshrl.u32 %v858, 7
        %v860 = vsub.s32 0, %v859
        %v861 = vrot.slane %v837, %v860
        %v862 = vlaneseq
        %v863 = vshrl.u32 %v862, 7
        %v864 = vsub.s32 0, %v863
        %v865 = vrot.slane %v838, %v864
        %v866 = vlaneseq
        %v867 = vshrl.u32 %v866, 7
        %v868 = vsub.s32 0, %v867
        %v869 = vrot.slane %v839, %v868
        %v874 = vmul.f32 %v748, %v857
        %v875 = vmul.f32 %v751, %v861
        %v876 = vmul.f32 %v756, %v865
        %v877 = vmul.f32 %v759, %v869
        %v882 = vlaneseq
        %v883 = vshrl.u32 %v882, 7
        %v884 = vsub.s32 0, %v883
        %v885 = vrot.slane %v846, %v884
        %v886 = vlaneseq
        %v887 = vshrl.u32 %v886, 7
        %v888 = vsub.s32 0, %v887
        %v889 = vrot.slane %v847, %v888
        %v890 = vlaneseq
        %v891 = vshrl.u32 %v890, 7
        %v892 = vsub.s32 0, %v891
        %v893 = vrot.slane %v848, %v892
        %v894 = vlaneseq
        %v895 = vshrl.u32 %v894, 7
        %v896 = vsub.s32 0, %v895
        %v897 = vrot.slane %v849, %v896
        %v902 = vadd.f32 %v874, %v885
        %v903 = vadd.f32 %v875, %v889
        %v904 = vadd.f32 %v876, %v893
        %v905 = vadd.f32 %v877, %v897
        %v906 = vmax.f32 %v902, 0.0
        %v907 = vmax.f32 %v903, 0.0
        %v908 = vmax.f32 %v904, 0.0
        %v909 = vmax.f32 %v905, 0.0
        %v910 = vadd.f32 %v906, %v371
        %v911 = vadd.f32 %v907, %v374
        %v912 = vadd.f32 %v908, %v379
        %v913 = vadd.f32 %v909, %v382
        %v914 = vpack.c.bf16 %v911, %v910
        %v915 = vpack.c.bf16 %v913, %v912
        %s916 = scalar_lea.vmem [#allocation7], 128
        %v917 = vld [vmem:[%s916] sm:$0xf]
        %v918 = vld [vmem:[%s916 + $0x4] sm:$0xf]
        %v919 = vld [vmem:[%s916 + $0x8] sm:$0xf]
        %v920 = vld [vmem:[%s916 + $0xc] sm:$0xf]
        %v921 = vld [vmem:[%s916 + $0x10] sm:$0xf]
        %v922 = vld [vmem:[%s916 + $0x14] sm:$0xf]
        %v923 = vld [vmem:[%s916 + $0x18] sm:$0xf]
        %v924 = vld [vmem:[%s916 + $0x1c] sm:$0xf]
        %v925 = vld [vmem:[%s916 + $0x20] sm:$0xf]
        %v926 = vld [vmem:[%s916 + $0x24] sm:$0xf]
        %v927 = vld [vmem:[%s916 + $0x28] sm:$0xf]
        %v928 = vld [vmem:[%s916 + $0x2c] sm:$0xf]
        %v929 = vld [vmem:[%s916 + $0x30] sm:$0xf]
        %v930 = vld [vmem:[%s916 + $0x34] sm:$0xf]
        %v931 = vld [vmem:[%s916 + $0x38] sm:$0xf]
        %v932 = vld [vmem:[%s916 + $0x3c] sm:$0xf]
        %v949 = vunpack.c.l.b16 %v917
        %v950 = vunpack.c.l.b16 %v918
        %v951 = vunpack.c.l.b16 %v919
        %v952 = vunpack.c.l.b16 %v920
        %v953 = vunpack.c.l.b16 %v921
        %v954 = vunpack.c.l.b16 %v922
        %v955 = vunpack.c.l.b16 %v923
        %v956 = vunpack.c.l.b16 %v924
        %v957 = vunpack.c.l.b16 %v925
        %v958 = vunpack.c.l.b16 %v926
        %v959 = vunpack.c.l.b16 %v927
        %v960 = vunpack.c.l.b16 %v928
        %v961 = vunpack.c.l.b16 %v929
        %v962 = vunpack.c.l.b16 %v930
        %v963 = vunpack.c.l.b16 %v931
        %v964 = vunpack.c.l.b16 %v932
        %v965 = vpack.c.b16 %v950, %v949
        %v966 = vpack.c.b16 %v952, %v951
        %v967 = vpack.c.b16 %v954, %v953
        %v968 = vpack.c.b16 %v956, %v955
        %v969 = vpack.c.b16 %v958, %v957
        %v970 = vpack.c.b16 %v960, %v959
        %v971 = vpack.c.b16 %v962, %v961
        %v972 = vpack.c.b16 %v964, %v963
        %981 = vmatprep.subr.bf16.mxu0 0
        %982 = vmatpush1.bf16.msra.mxu0 %v965
        %983 = vmatprep.subr.bf16.mxu0 0
        %984 = vmatpush1.bf16.msra.mxu0 %v966
        %985 = vmatprep.subr.bf16.mxu0 0
        %986 = vmatpush1.bf16.msra.mxu0 %v967
        %987 = vmatprep.subr.bf16.mxu0 0
        %988 = vmatpush1.bf16.msra.mxu0 %v968
        %989 = vmatprep.subr.bf16.mxu0 0
        %990 = vmatpush1.bf16.msra.mxu0 %v969
        %991 = vmatprep.subr.bf16.mxu0 0
        %992 = vmatpush1.bf16.msra.mxu0 %v970
        %993 = vmatprep.subr.bf16.mxu0 0
        %994 = vmatpush1.bf16.msra.mxu0 %v971
        %995 = vmatprep.subr.bf16.mxu0 0
        %996 = vmatpush1.bf16.msra.mxu0 %v972
        %997 = vmatprep.subr.bf16.mxu0 0
        %998 = vmatpush1.bf16.msra.mxu0 0
        %999 = vmatprep.subr.bf16.mxu0 0
        %1000 = vmatpush1.bf16.msra.mxu0 0
        %1001 = vmatprep.subr.bf16.mxu0 0
        %1002 = vmatpush1.bf16.msra.mxu0 0
        %1003 = vmatprep.subr.bf16.mxu0 0
        %1004 = vmatpush1.bf16.msra.mxu0 0
        %1005 = vmatprep.subr.bf16.mxu0 0
        %1006 = vmatpush1.bf16.msra.mxu0 0
        %1007 = vmatprep.subr.bf16.mxu0 0
        %1008 = vmatpush1.bf16.msra.mxu0 0
        %1009 = vmatprep.subr.bf16.mxu0 0
        %1010 = vmatpush1.bf16.msra.mxu0 0
        %1011 = vmatprep.subr.bf16.mxu0 0
        %1012 = vmatpush1.bf16.msra.mxu0 0
        %1013 = vmatprep.mubr.bf16.mxu0 0
        %1014 = vmatmul.mubr.bf16.gmra.mrb[0].mxu0 %v914
        %v1015 = vpop.f32.mrb[0].mxu0
        %v1016 = vadd.f32 0.0, %v1015
        %v1017 = vpop.f32.mrb[0].mxu0
        %v1018 = vpop.f32.mrb[0].mxu0
        %v1019 = vadd.f32 0.0, %v1018
        %v1020 = vpop.f32.mrb[0].mxu0
        %1021 = vmatprep.mubr.bf16.mxu0 0
        %1022 = vmatmul.mubr.bf16.gmra.mrb[0].mxu0 %v915
        %v1023 = vpop.f32.mrb[0].mxu0
        %v1024 = vadd.f32 0.0, %v1023
        %v1025 = vpop.f32.mrb[0].mxu0
        %v1026 = vpop.f32.mrb[0].mxu0
        %v1027 = vadd.f32 0.0, %v1026
        %v1028 = vpop.f32.mrb[0].mxu0
        %1029 = vdwg.mxu0
        %v1030 = vrot.slane %v1016, 4
        %v1031 = vadd.f32 %v1016, %v1030
        %v1032 = vrot.slane %v1031, 2
        %v1033 = vadd.f32 %v1031, %v1032
        %v1034 = vrot.slane %v1033, 1
        %v1035 = vadd.f32 %v1033, %v1034
        %v1036 = vrot.slane %v1019, 4
        %v1037 = vadd.f32 %v1019, %v1036
        %v1038 = vrot.slane %v1037, 2
        %v1039 = vadd.f32 %v1037, %v1038
        %v1040 = vrot.slane %v1039, 1
        %v1041 = vadd.f32 %v1039, %v1040
        %v1042 = vrot.slane %v1024, 4
        %v1043 = vadd.f32 %v1024, %v1042
        %v1044 = vrot.slane %v1043, 2
        %v1045 = vadd.f32 %v1043, %v1044
        %v1046 = vrot.slane %v1045, 1
        %v1047 = vadd.f32 %v1045, %v1046
        %v1048 = vrot.slane %v1027, 4
        %v1049 = vadd.f32 %v1027, %v1048
        %v1050 = vrot.slane %v1049, 2
        %v1051 = vadd.f32 %v1049, %v1050
        %v1052 = vrot.slane %v1051, 1
        %v1053 = vadd.f32 %v1051, %v1052
        %v1054 = vmul.f32 %v1035, 0.125
        %v1055 = vmul.f32 %v1041, 0.125
        %v1056 = vmul.f32 %v1047, 0.125
        %v1057 = vmul.f32 %v1053, 0.125
        %v1058 = vsub.f32 %v1016, %v1054
        %v1059 = vsub.f32 %v1019, %v1055
        %v1060 = vsub.f32 %v1024, %v1056
        %v1061 = vsub.f32 %v1027, %v1057
        %v1062 = vmul.f32 %v1058, %v1058
        %v1063 = vmul.f32 %v1059, %v1059
        %v1064 = vmul.f32 %v1060, %v1060
        %v1065 = vmul.f32 %v1061, %v1061
        %v1066 = vrot.slane %v1062, 4
        %v1067 = vadd.f32 %v1062, %v1066
        %v1068 = vrot.slane %v1067, 2
        %v1069 = vadd.f32 %v1067, %v1068
        %v1070 = vrot.slane %v1069, 1
        %v1071 = vadd.f32 %v1069, %v1070
        %v1072 = vrot.slane %v1063, 4
        %v1073 = vadd.f32 %v1063, %v1072
        %v1074 = vrot.slane %v1073, 2
        %v1075 = vadd.f32 %v1073, %v1074
        %v1076 = vrot.slane %v1075, 1
        %v1077 = vadd.f32 %v1075, %v1076
        %v1078 = vrot.slane %v1064, 4
        %v1079 = vadd.f32 %v1064, %v1078
        %v1080 = vrot.slane %v1079, 2
        %v1081 = vadd.f32 %v1079, %v1080
        %v1082 = vrot.slane %v1081, 1
        %v1083 = vadd.f32 %v1081, %v1082
        %v1084 = vrot.slane %v1065, 4
        %v1085 = vadd.f32 %v1065, %v1084
        %v1086 = vrot.slane %v1085, 2
        %v1087 = vadd.f32 %v1085, %v1086
        %v1088 = vrot.slane %v1087, 1
        %v1089 = vadd.f32 %v1087, %v1088
        %v1090 = vmul.f32 %v1071, 0.125
        %v1091 = vmul.f32 %v1077, 0.125
        %v1092 = vmul.f32 %v1083, 0.125
        %v1093 = vmul.f32 %v1089, 0.125
        %s1094 = scalar_lea.vmem %s4, 2
        %v1095 = vld [vmem:[%s1094] sm:$0x1]
        %v1096 = vadd.f32 %v1090, 1e-05
        %v1097 = vadd.f32 %v1091, 1e-05
        %v1098 = vadd.f32 %v1092, 1e-05
        %v1099 = vadd.f32 %v1093, 1e-05
        %v1100 = vrsqrt.pop %v1096
        %v1101 = vrsqrt.pop %v1097
        %v1102 = vrsqrt.pop %v1098
        %v1103 = vrsqrt.pop %v1099
        %v1104 = vmul.f32 %v1095, %v1100
        %v1105 = vmul.f32 %v1095, %v1101
        %v1106 = vmul.f32 %v1095, %v1102
        %v1107 = vmul.f32 %v1095, %v1103
        %s1108 = scalar_lea.vmem %s5, 2
        %v1109 = vld [vmem:[%s1108] sm:$0x1]
        %v1110 = vmul.f32 %v1054, %v1104
        %v1111 = vmul.f32 %v1055, %v1105
        %v1112 = vmul.f32 %v1056, %v1106
        %v1113 = vmul.f32 %v1057, %v1107
        %v1114 = vsub.f32 %v1109, %v1110
        %v1115 = vsub.f32 %v1109, %v1111
        %v1116 = vsub.f32 %v1109, %v1112
        %v1117 = vsub.f32 %v1109, %v1113
        %v1122 = vlaneseq
        %v1123 = vshrl.u32 %v1122, 7
        %v1124 = vsub.s32 0, %v1123
        %v1125 = vrot.slane %v1104, %v1124
        %v1126 = vlaneseq
        %v1127 = vshrl.u32 %v1126, 7
        %v1128 = vsub.s32 0, %v1127
        %v1129 = vrot.slane %v1105, %v1128
        %v1130 = vlaneseq
        %v1131 = vshrl.u32 %v1130, 7
        %v1132 = vsub.s32 0, %v1131
        %v1133 = vrot.slane %v1106, %v1132
        %v1134 = vlaneseq
        %v1135 = vshrl.u32 %v1134, 7
        %v1136 = vsub.s32 0, %v1135
        %v1137 = vrot.slane %v1107, %v1136
        %v1142 = vmul.f32 %v1016, %v1125
        %v1143 = vmul.f32 %v1019, %v1129
        %v1144 = vmul.f32 %v1024, %v1133
        %v1145 = vmul.f32 %v1027, %v1137
        %v1150 = vlaneseq
        %v1151 = vshrl.u32 %v1150, 7
        %v1152 = vsub.s32 0, %v1151
        %v1153 = vrot.slane %v1114, %v1152
        %v1154 = vlaneseq
        %v1155 = vshrl.u32 %v1154, 7
        %v1156 = vsub.s32 0, %v1155
        %v1157 = vrot.slane %v1115, %v1156
        %v1158 = vlaneseq
        %v1159 = vshrl.u32 %v1158, 7
        %v1160 = vsub.s32 0, %v1159
        %v1161 = vrot.slane %v1116, %v1160
        %v1162 = vlaneseq
        %v1163 = vshrl.u32 %v1162, 7
        %v1164 = vsub.s32 0, %v1163
        %v1165 = vrot.slane %v1117, %v1164
        %v1170 = vadd.f32 %v1142, %v1153
        %v1171 = vadd.f32 %v1143, %v1157
        %v1172 = vadd.f32 %v1144, %v1161
        %v1173 = vadd.f32 %v1145, %v1165
        %v1174 = vmax.f32 %v1170, 0.0
        %v1175 = vmax.f32 %v1171, 0.0
        %v1176 = vmax.f32 %v1172, 0.0
        %v1177 = vmax.f32 %v1173, 0.0
        %v1178 = vpack.c.bf16 %v1175, %v1174
        %v1179 = vpack.c.bf16 %v1177, %v1176
        %s1180 = scalar_lea.vmem [#allocation7], 192
        %v1181 = vld [vmem:[%s1180] sm:$0xf]
        %v1182 = vld [vmem:[%s1180 + $0x4] sm:$0xf]
        %v1183 = vld [vmem:[%s1180 + $0x8] sm:$0xf]
        %v1184 = vld [vmem:[%s1180 + $0xc] sm:$0xf]
        %v1185 = vld [vmem:[%s1180 + $0x10] sm:$0xf]
        %v1186 = vld [vmem:[%s1180 + $0x14] sm:$0xf]
        %v1187 = vld [vmem:[%s1180 + $0x18] sm:$0xf]
        %v1188 = vld [vmem:[%s1180 + $0x1c] sm:$0xf]
        %v1189 = vld [vmem:[%s1180 + $0x20] sm:$0xf]
        %v1190 = vld [vmem:[%s1180 + $0x24] sm:$0xf]
        %v1191 = vld [vmem:[%s1180 + $0x28] sm:$0xf]
        %v1192 = vld [vmem:[%s1180 + $0x2c] sm:$0xf]
        %v1193 = vld [vmem:[%s1180 + $0x30] sm:$0xf]
        %v1194 = vld [vmem:[%s1180 + $0x34] sm:$0xf]
        %v1195 = vld [vmem:[%s1180 + $0x38] sm:$0xf]
        %v1196 = vld [vmem:[%s1180 + $0x3c] sm:$0xf]
        %v1213 = vunpack.c.l.b16 %v1181
        %v1214 = vunpack.c.l.b16 %v1182
        %v1215 = vunpack.c.l.b16 %v1183
        %v1216 = vunpack.c.l.b16 %v1184
        %v1217 = vunpack.c.l.b16 %v1185
        %v1218 = vunpack.c.l.b16 %v1186
        %v1219 = vunpack.c.l.b16 %v1187
        %v1220 = vunpack.c.l.b16 %v1188
        %v1221 = vunpack.c.l.b16 %v1189
        %v1222 = vunpack.c.l.b16 %v1190
        %v1223 = vunpack.c.l.b16 %v1191
        %v1224 = vunpack.c.l.b16 %v1192
        %v1225 = vunpack.c.l.b16 %v1193
        %v1226 = vunpack.c.l.b16 %v1194
        %v1227 = vunpack.c.l.b16 %v1195
        %v1228 = vunpack.c.l.b16 %v1196
        %v1229 = vpack.c.b16 %v1214, %v1213
        %v1230 = vpack.c.b16 %v1216, %v1215
        %v1231 = vpack.c.b16 %v1218, %v1217
        %v1232 = vpack.c.b16 %v1220, %v1219
        %v1233 = vpack.c.b16 %v1222, %v1221
        %v1234 = vpack.c.b16 %v1224, %v1223
        %v1235 = vpack.c.b16 %v1226, %v1225
        %v1236 = vpack.c.b16 %v1228, %v1227
        %1245 = vmatprep.subr.bf16.mxu0 0
        %1246 = vmatpush1.bf16.msra.mxu0 %v1229
        %1247 = vmatprep.subr.bf16.mxu0 0
        %1248 = vmatpush1.bf16.msra.mxu0 %v1230
        %1249 = vmatprep.subr.bf16.mxu0 0
        %1250 = vmatpush1.bf16.msra.mxu0 %v1231
        %1251 = vmatprep.subr.bf16.mxu0 0
        %1252 = vmatpush1.bf16.msra.mxu0 %v1232
        %1253 = vmatprep.subr.bf16.mxu0 0
        %1254 = vmatpush1.bf16.msra.mxu0 %v1233
        %1255 = vmatprep.subr.bf16.mxu0 0
        %1256 = vmatpush1.bf16.msra.mxu0 %v1234
        %1257 = vmatprep.subr.bf16.mxu0 0
        %1258 = vmatpush1.bf16.msra.mxu0 %v1235
        %1259 = vmatprep.subr.bf16.mxu0 0
        %1260 = vmatpush1.bf16.msra.mxu0 %v1236
        %1261 = vmatprep.subr.bf16.mxu0 0
        %1262 = vmatpush1.bf16.msra.mxu0 0
        %1263 = vmatprep.subr.bf16.mxu0 0
        %1264 = vmatpush1.bf16.msra.mxu0 0
        %1265 = vmatprep.subr.bf16.mxu0 0
        %1266 = vmatpush1.bf16.msra.mxu0 0
        %1267 = vmatprep.subr.bf16.mxu0 0
        %1268 = vmatpush1.bf16.msra.mxu0 0
        %1269 = vmatprep.subr.bf16.mxu0 0
        %1270 = vmatpush1.bf16.msra.mxu0 0
        %1271 = vmatprep.subr.bf16.mxu0 0
        %1272 = vmatpush1.bf16.msra.mxu0 0
        %1273 = vmatprep.subr.bf16.mxu0 0
        %1274 = vmatpush1.bf16.msra.mxu0 0
        %1275 = vmatprep.subr.bf16.mxu0 0
        %1276 = vmatpush1.bf16.msra.mxu0 0
        %1277 = vmatprep.mubr.bf16.mxu0 0
        %1278 = vmatmul.mubr.bf16.gmra.mrb[0].mxu0 %v1178
        %v1279 = vpop.f32.mrb[0].mxu0
        %v1280 = vadd.f32 0.0, %v1279
        %v1281 = vpop.f32.mrb[0].mxu0
        %v1282 = vpop.f32.mrb[0].mxu0
        %v1283 = vadd.f32 0.0, %v1282
        %v1284 = vpop.f32.mrb[0].mxu0
        %1285 = vmatprep.mubr.bf16.mxu0 0
        %1286 = vmatmul.mubr.bf16.gmra.mrb[0].mxu0 %v1179
        %v1287 = vpop.f32.mrb[0].mxu0
        %v1288 = vadd.f32 0.0, %v1287
        %v1289 = vpop.f32.mrb[0].mxu0
        %v1290 = vpop.f32.mrb[0].mxu0
        %v1291 = vadd.f32 0.0, %v1290
        %v1292 = vpop.f32.mrb[0].mxu0
        %1293 = vdwg.mxu0
        %v1294 = vrot.slane %v1280, 4
        %v1295 = vadd.f32 %v1280, %v1294
        %v1296 = vrot.slane %v1295, 2
        %v1297 = vadd.f32 %v1295, %v1296
        %v1298 = vrot.slane %v1297, 1
        %v1299 = vadd.f32 %v1297, %v1298
        %v1300 = vrot.slane %v1283, 4
        %v1301 = vadd.f32 %v1283, %v1300
        %v1302 = vrot.slane %v1301, 2
        %v1303 = vadd.f32 %v1301, %v1302
        %v1304 = vrot.slane %v1303, 1
        %v1305 = vadd.f32 %v1303, %v1304
        %v1306 = vrot.slane %v1288, 4
        %v1307 = vadd.f32 %v1288, %v1306
        %v1308 = vrot.slane %v1307, 2
        %v1309 = vadd.f32 %v1307, %v1308
        %v1310 = vrot.slane %v1309, 1
        %v1311 = vadd.f32 %v1309, %v1310
        %v1312 = vrot.slane %v1291, 4
        %v1313 = vadd.f32 %v1291, %v1312
        %v1314 = vrot.slane %v1313, 2
        %v1315 = vadd.f32 %v1313, %v1314
        %v1316 = vrot.slane %v1315, 1
        %v1317 = vadd.f32 %v1315, %v1316
        %v1318 = vmul.f32 %v1299, 0.125
        %v1319 = vmul.f32 %v1305, 0.125
        %v1320 = vmul.f32 %v1311, 0.125
        %v1321 = vmul.f32 %v1317, 0.125
        %v1322 = vsub.f32 %v1280, %v1318
        %v1323 = vsub.f32 %v1283, %v1319
        %v1324 = vsub.f32 %v1288, %v1320
        %v1325 = vsub.f32 %v1291, %v1321
        %v1326 = vmul.f32 %v1322, %v1322
        %v1327 = vmul.f32 %v1323, %v1323
        %v1328 = vmul.f32 %v1324, %v1324
        %v1329 = vmul.f32 %v1325, %v1325
        %v1330 = vrot.slane %v1326, 4
        %v1331 = vadd.f32 %v1326, %v1330
        %v1332 = vrot.slane %v1331, 2
        %v1333 = vadd.f32 %v1331, %v1332
        %v1334 = vrot.slane %v1333, 1
        %v1335 = vadd.f32 %v1333, %v1334
        %v1336 = vrot.slane %v1327, 4
        %v1337 = vadd.f32 %v1327, %v1336
        %v1338 = vrot.slane %v1337, 2
        %v1339 = vadd.f32 %v1337, %v1338
        %v1340 = vrot.slane %v1339, 1
        %v1341 = vadd.f32 %v1339, %v1340
        %v1342 = vrot.slane %v1328, 4
        %v1343 = vadd.f32 %v1328, %v1342
        %v1344 = vrot.slane %v1343, 2
        %v1345 = vadd.f32 %v1343, %v1344
        %v1346 = vrot.slane %v1345, 1
        %v1347 = vadd.f32 %v1345, %v1346
        %v1348 = vrot.slane %v1329, 4
        %v1349 = vadd.f32 %v1329, %v1348
        %v1350 = vrot.slane %v1349, 2
        %v1351 = vadd.f32 %v1349, %v1350
        %v1352 = vrot.slane %v1351, 1
        %v1353 = vadd.f32 %v1351, %v1352
        %v1354 = vmul.f32 %v1335, 0.125
        %v1355 = vmul.f32 %v1341, 0.125
        %v1356 = vmul.f32 %v1347, 0.125
        %v1357 = vmul.f32 %v1353, 0.125
        %s1358 = scalar_lea.vmem %s4, 3
        %v1359 = vld [vmem:[%s1358] sm:$0x1]
        %v1360 = vadd.f32 %v1354, 1e-05
        %v1361 = vadd.f32 %v1355, 1e-05
        %v1362 = vadd.f32 %v1356, 1e-05
        %v1363 = vadd.f32 %v1357, 1e-05
        %v1364 = vrsqrt.pop %v1360
        %v1365 = vrsqrt.pop %v1361
        %v1366 = vrsqrt.pop %v1362
        %v1367 = vrsqrt.pop %v1363
        %v1368 = vmul.f32 %v1359, %v1364
        %v1369 = vmul.f32 %v1359, %v1365
        %v1370 = vmul.f32 %v1359, %v1366
        %v1371 = vmul.f32 %v1359, %v1367
        %s1372 = scalar_lea.vmem %s5, 3
        %v1373 = vld [vmem:[%s1372] sm:$0x1]
        %v1374 = vmul.f32 %v1318, %v1368
        %v1375 = vmul.f32 %v1319, %v1369
        %v1376 = vmul.f32 %v1320, %v1370
        %v1377 = vmul.f32 %v1321, %v1371
        %v1378 = vsub.f32 %v1373, %v1374
        %v1379 = vsub.f32 %v1373, %v1375
        %v1380 = vsub.f32 %v1373, %v1376
        %v1381 = vsub.f32 %v1373, %v1377
        %v1386 = vlaneseq
        %v1387 = vshrl.u32 %v1386, 7
        %v1388 = vsub.s32 0, %v1387
        %v1389 = vrot.slane %v1368, %v1388
        %v1390 = vlaneseq
        %v1391 = vshrl.u32 %v1390, 7
        %v1392 = vsub.s32 0, %v1391
        %v1393 = vrot.slane %v1369, %v1392
        %v1394 = vlaneseq
        %v1395 = vshrl.u32 %v1394, 7
        %v1396 = vsub.s32 0, %v1395
        %v1397 = vrot.slane %v1370, %v1396
        %v1398 = vlaneseq
        %v1399 = vshrl.u32 %v1398, 7
        %v1400 = vsub.s32 0, %v1399
        %v1401 = vrot.slane %v1371, %v1400
        %v1406 = vmul.f32 %v1280, %v1389
        %v1407 = vmul.f32 %v1283, %v1393
        %v1408 = vmul.f32 %v1288, %v1397
        %v1409 = vmul.f32 %v1291, %v1401
        %v1414 = vlaneseq
        %v1415 = vshrl.u32 %v1414, 7
        %v1416 = vsub.s32 0, %v1415
        %v1417 = vrot.slane %v1378, %v1416
        %v1418 = vlaneseq
        %v1419 = vshrl.u32 %v1418, 7
        %v1420 = vsub.s32 0, %v1419
        %v1421 = vrot.slane %v1379, %v1420
        %v1422 = vlaneseq
        %v1423 = vshrl.u32 %v1422, 7
        %v1424 = vsub.s32 0, %v1423
        %v1425 = vrot.slane %v1380, %v1424
        %v1426 = vlaneseq
        %v1427 = vshrl.u32 %v1426, 7
        %v1428 = vsub.s32 0, %v1427
        %v1429 = vrot.slane %v1381, %v1428
        %v1434 = vadd.f32 %v1406, %v1417
        %v1435 = vadd.f32 %v1407, %v1421
        %v1436 = vadd.f32 %v1408, %v1425
        %v1437 = vadd.f32 %v1409, %v1429
        %v1438 = vmax.f32 %v1434, 0.0
        %v1439 = vmax.f32 %v1435, 0.0
        %v1440 = vmax.f32 %v1436, 0.0
        %v1441 = vmax.f32 %v1437, 0.0
        %v1442 = vadd.f32 %v1438, %v910
        %v1443 = vadd.f32 %v1439, %v911
        %v1444 = vadd.f32 %v1440, %v912
        %v1445 = vadd.f32 %v1441, %v913
        %1446 = vst [vmem:[%s298] sm:$0xff] %v1442
        %1447 = vst [vmem:[%s298 + $0x8] sm:$0xff] %v1443
        %1448 = vst [vmem:[%s298 + $0x10] sm:$0xff] %v1444
        %1449 = vst [vmem:[%s298 + $0x18] sm:$0xff] %v1445
        %s1450 = sand.u32 %s163, 1
        %s1451 = scalar_lea.sflag [#allocation4], %s1450
        %s1452 = sand.u32 %s163, 1
        %s1453 = smul.addr %s1452, 32
        %s1454 = scalar_lea.vmem [#allocation8], %s1453
        // Predicated region
        $region57: #{tpu_custom_call.1} parent=43 // pred_check
          %p1455 = pneg %p173
        $region58: #{tpu_custom_call.1} parent=43 // pred_check_branch
          %1457 = sbr.rel (%p1455) target = $region60
        $region59: #{tpu_custom_call.1} parent=43 // pred_region
          %s1459 = ssub.s32 512, 512
          %1460 = vsyncadd %s1451, %s1459
          %s1461 = smul.addr %s24, 4
          %s1462 = smul.addr %s1461, 128
          %s1463 = scalar_lea.hbm %s6, %s1462
          %s1464 = sshll.u32 %s1454, 4
          %s1465 = int_to_ptr.vmem [resolvable:$true] %s1464
          %1470 = dma.vmem_to_hbm [thread:$0]  %s1465, 512, %s1463, %s1451, 128, 128, 8
        $region60: #{tpu_custom_call.1} parent=43 // pred_fallthru
          _
      $region44: #{tpu_custom_call.1} parent=5 // pred_fallthru
        _
      %p1471 = scmp.le.s32.totalorder 2, %s19
      // Predicated region
      $region61: #{tpu_custom_call.1} parent=5 // pred_check
        %p1472 = pneg %p1471
      $region62: #{tpu_custom_call.1} parent=5 // pred_check_branch
        %1474 = sbr.rel (%p1472) target = $region64
      $region63: #{tpu_custom_call.1} parent=5 // pred_region
        %s1475 = ssub.s32 %s19, 2
        // Predicated region
        $region65: #{tpu_custom_call.1} parent=63 // pred_check
          %p1476 = pneg %p179
        $region66: #{tpu_custom_call.1} parent=63 // pred_check_branch
          %1478 = sbr.rel (%p1476) target = $region68
        $region67: #{tpu_custom_call.1} parent=63 // pred_region
          %s1479 = sand.u32 %s164, 1
          %s1480 = scalar_lea.sflag [#allocation4], %s1479
          %s1481 = sand.u32 %s164, 1
          %s1482 = smul.addr %s1481, 32
          %s1483 = scalar_lea.vmem [#allocation8], %s1482
          %1484 = dma.done %s1480, 512
        $region68: #{tpu_custom_call.1} parent=63 // pred_fallthru
          _
      $region64: #{tpu_custom_call.1} parent=5 // pred_fallthru
        _
    $region6: #{tpu_custom_call.1} parent=1 // loop_footer
      %s23 = sadd.s32 1, %s19
    $region7: #{tpu_custom_call.1} parent=1 // loop_footer_branch
      %18 = sbr.rel target = $region3
    $region8: #{tpu_custom_call.1} parent=1 // loop_exit
      _
    %1485 = vsyncpa [#allocation3], 1
    %s1486 = scalar_lea.sflag [#allocation3], 1
    %1487 = vsyncpa %s1486, 1
    %1488 = vsyncpa [#allocation6], 1
    %1489 = vsyncpa [#allocation4], 1
    %s1490 = scalar_lea.sflag [#allocation4], 1
    %1491 = vsyncpa %s1490, 1

</llo_original>
